<compile_context>
chip_gen: v7x
topology: tpu7x:2x2x1
jax: 0.10.0
libtpu: 0.0.40
codegen_flags: <defaults>
</compile_context>

<pallas_src>
import functools

import jax
import jax.numpy as jnp
from jax import lax
from jax.experimental import pallas as pl
from jax.experimental.pallas import tpu as pltpu

embedding_size = 10
hidden_size = 8
input_size = 4          # vocab size
num_class = 4
num_layers = 2          # two stacked tanh-RNN layers (hard-coded in the kernel)


def fused_emb_rnn_fc_kernel(tok_ref, emb_ref, wih0_ref, whh0_ref, b0_ref,
                            wih1_ref, whh1_ref, b1_ref, wfc_ref, bfc_ref,
                            out_ref, h_scr, *, batch, seq):
    """Whole forward pass in one kernel.

    tok_ref : (T*B, 1) int32  time-major tokens (row = t*B + b)
    emb_ref : (V, E)          embedding table
    wih0    : (E, H)   whh0 : (H, H)   b0 : (1, H)   (b0 = b_ih_l0 + b_hh_l0)
    wih1    : (H, H)   whh1 : (H, H)   b1 : (1, H)   (b1 = b_ih_l1 + b_hh_l1)
    wfc     : (H, C)   bfc  : (1, C)
    out_ref : (B*T, C)        batch-major logits (row = b*T + t)
    h_scr   : (B, T, H) VMEM scratch for per-step layer-1 hidden states
    """
    B, T = batch, seq
    V = emb_ref.shape[0]
    H = whh0_ref.shape[0]

    # ---- loop-invariant work, hoisted off the serial recurrence -----------
    # Fused embedding lookup + layer-0 input projection + layer-0 bias:
    #   x_proj = onehot(tok) @ (emb @ W_ih0 + b0)      -> (T*B, H), time-major
    # Folding b0 into the (V, H) projected table is exact because every one-hot
    # row sums to 1; it replaces a (T*B, H) add with a (V, H) add done once.
    emb_proj = jnp.dot(emb_ref[...], wih0_ref[...],
                       preferred_element_type=jnp.float32) + b0_ref[...]   # (V, H)
    iota_v = lax.broadcasted_iota(jnp.int32, (T * B, V), 1)
    onehot = jnp.where(tok_ref[...] == iota_v,
                       jnp.float32(1.0), jnp.float32(0.0))                 # (T*B, V)
    x_proj = jnp.dot(onehot, emb_proj,
                     preferred_element_type=jnp.float32)                   # (T*B, H)

    # Weights / biases loaded once (stay in vregs across the unrolled loop).
    whh0 = whh0_ref[...]                                                   # (H, H)
    w1 = jnp.concatenate([wih1_ref[...], whh1_ref[...]], axis=0)           # (2H, H)
    b1 = jnp.broadcast_to(b1_ref[...], (B, H))                             # hoisted bcast

    h0 = jnp.zeros((B, H), jnp.float32)
    h1 = jnp.zeros((B, H), jnp.float32)

    # ---- serial time recurrence: fully unrolled (T is static) -------------
    for t in range(T):
        xt = x_proj[t * B:(t + 1) * B, :]                                  # (B, H)
        h0 = jnp.tanh(xt + jnp.dot(h0, whh0,
                                   preferred_element_type=jnp.float32))
        h1 = jnp.tanh(jnp.dot(jnp.concatenate([h0, h1], axis=1), w1,
                              preferred_element_type=jnp.float32) + b1)
        h_scr[:, t, :] = h1                                                # batch-major slot

    # ---- hoisted FC projection + single output store -----------------------
    hs = h_scr[...].reshape(B * T, H)                                      # (B*T, H)
    logits = jnp.dot(hs, wfc_ref[...],
                     preferred_element_type=jnp.float32) + bfc_ref[...]    # (B*T, C)
    out_ref[...] = logits.astype(out_ref.dtype)


def init_params(key):
    """Deterministic parameter init (PyTorch-style uniform bounds)."""
    ks = jax.random.split(key, 12)
    bnd_rnn = 1.0 / jnp.sqrt(hidden_size)
    bnd_fc = 1.0 / jnp.sqrt(hidden_size)

    def u(k, shape, bnd):
        return jax.random.uniform(k, shape, jnp.float32, -bnd, bnd)

    params = {
        "emb":   jax.random.normal(ks[0], (input_size, embedding_size), jnp.float32),
        # layer 0
        "w_ih0": u(ks[1], (embedding_size, hidden_size), bnd_rnn),   # W_ih_l0.T
        "w_hh0": u(ks[2], (hidden_size, hidden_size), bnd_rnn),      # W_hh_l0.T
        "b0":    (u(ks[3], (hidden_size,), bnd_rnn)
                  + u(ks[4], (hidden_size,), bnd_rnn)).reshape(1, hidden_size),
        # layer 1
        "w_ih1": u(ks[5], (hidden_size, hidden_size), bnd_rnn),      # W_ih_l1.T
        "w_hh1": u(ks[6], (hidden_size, hidden_size), bnd_rnn),      # W_hh_l1.T
        "b1":    (u(ks[7], (hidden_size,), bnd_rnn)
                  + u(ks[8], (hidden_size,), bnd_rnn)).reshape(1, hidden_size),
        # fc
        "w_fc":  u(ks[9], (hidden_size, num_class), bnd_fc),         # fc.weight.T
        "b_fc":  u(ks[10], (num_class,), bnd_fc).reshape(1, num_class),
    }
    return params


@jax.jit
def model_forward(x_tokens, params):
    """x_tokens: int32 (B, T) -> logits (B*T, num_class) (== PyTorch x.view(-1, C))."""
    B, T = x_tokens.shape
    # Only glue outside the kernel: flatten tokens time-major (a 64-byte int array).
    tok_tm = jnp.transpose(x_tokens).reshape(T * B, 1).astype(jnp.int32)

    vmem = pl.BlockSpec(memory_space=pltpu.MemorySpace.VMEM)
    # NOTE: gridless on purpose — whole working set is a few KB, so the cost is
    # dominated by launch + tiny-DMA overhead.  For large batches, add
    # grid=(pl.cdiv(B, TB),) with dimension_semantics=("parallel",) so the batch
    # shards across v7x's 2 TensorCores.
    out = pl.pallas_call(
        functools.partial(fused_emb_rnn_fc_kernel, batch=B, seq=T),
        out_shape=jax.ShapeDtypeStruct((B * T, num_class), jnp.float32),
        in_specs=[vmem] * 10,
        out_specs=vmem,
        scratch_shapes=[pltpu.VMEM((B, T, hidden_size), jnp.float32)],
    )(tok_tm,
      params["emb"], params["w_ih0"], params["w_hh0"], params["b0"],
      params["w_ih1"], params["w_hh1"], params["b1"],
      params["w_fc"], params["b_fc"])
    return out


def model_forward_ref(x_tokens, params):
    """Pure-JAX reference of the same forward pass (for correctness check)."""
    xe = params["emb"][x_tokens].astype(jnp.float32)      # (B, T, E)
    B, T, _ = xe.shape
    h0 = jnp.zeros((B, hidden_size), jnp.float32)
    h1 = jnp.zeros((B, hidden_size), jnp.float32)

    def step(carry, xt):
        h0, h1 = carry
        h0n = jnp.tanh(xt @ params["w_ih0"] + h0 @ params["w_hh0"] + params["b0"])
        h1n = jnp.tanh(h0n @ params["w_ih1"] + h1 @ params["w_hh1"] + params["b1"])
        y = h1n @ params["w_fc"] + params["b_fc"]
        return (h0n, h1n), y

    _, ys = lax.scan(step, (h0, h1), jnp.transpose(xe, (1, 0, 2)))   # ys: (T, B, C)
    return jnp.transpose(ys, (1, 0, 2)).reshape(-1, num_class)


if __name__ == "__main__":
    key = jax.random.PRNGKey(0)
    k_param, k_data = jax.random.split(key)

    params = init_params(k_param)

    batch, seq = 2, 8
    x = jax.random.randint(k_data, (batch, seq), 0, input_size, dtype=jnp.int32)

    out = jax.block_until_ready(model_forward(x, params))
    ref = jax.block_until_ready(model_forward_ref(x, params))

    assert out.shape == (batch * seq, num_class)
    assert jnp.allclose(out, ref, atol=1e-4, rtol=1e-4)

    print("KERNEL_OK")
</pallas_src>

<mosaic_0001>
module attributes {stable_mosaic.version = 11 : i64} {
  func.func @fused_emb_rnn_fc_kernel(%arg0: memref<16x1xi32, #tpu.memory_space<vmem>>, %arg1: memref<4x10xf32, #tpu.memory_space<vmem>>, %arg2: memref<10x8xf32, #tpu.memory_space<vmem>>, %arg3: memref<8x8xf32, #tpu.memory_space<vmem>>, %arg4: memref<1x8xf32, #tpu.memory_space<vmem>>, %arg5: memref<8x8xf32, #tpu.memory_space<vmem>>, %arg6: memref<8x8xf32, #tpu.memory_space<vmem>>, %arg7: memref<1x8xf32, #tpu.memory_space<vmem>>, %arg8: memref<8x4xf32, #tpu.memory_space<vmem>>, %arg9: memref<1x4xf32, #tpu.memory_space<vmem>>, %arg10: memref<16x4xf32, #tpu.memory_space<vmem>>, %arg11: memref<2x8x8xf32, #tpu.memory_space<vmem>>) attributes {dimension_semantics = [], scalar_prefetch = 0 : i64, scratch_operands = 1 : i64, tpu.core_type = #tpu.core_type<tc>} {
    %c0 = arith.constant 0 : index
    %c0_0 = arith.constant 0 : index
    %0 = vector.load %arg1[%c0, %c0_0] : memref<4x10xf32, #tpu.memory_space<vmem>>, vector<4x10xf32>
    %c0_1 = arith.constant 0 : index
    %c0_2 = arith.constant 0 : index
    %1 = vector.load %arg2[%c0_1, %c0_2] : memref<10x8xf32, #tpu.memory_space<vmem>>, vector<10x8xf32>
    %cst = arith.constant dense<0.000000e+00> : vector<4x8xf32>
    %2 = tpu.matmul %0, %1, %cst {dimension_numbers = #tpu.dot_dimension_numbers<[1], [0], [0], [1], [0, 0, 1, 1], [], []>} : vector<4x10xf32>, vector<10x8xf32>, vector<4x8xf32> -> vector<4x8xf32>
    %c0_3 = arith.constant 0 : index
    %c0_4 = arith.constant 0 : index
    %3 = vector.load %arg4[%c0_3, %c0_4] : memref<1x8xf32, #tpu.memory_space<vmem>>, vector<1x8xf32>
    %4 = vector.broadcast %3 : vector<1x8xf32> to vector<4x8xf32>
    %5 = arith.addf %2, %4 : vector<4x8xf32>
    %6 = tpu.iota {dimensions = array<i32: 1>} : vector<16x4xi32>
    %c0_5 = arith.constant 0 : index
    %c0_6 = arith.constant 0 : index
    %7 = vector.load %arg0[%c0_5, %c0_6] : memref<16x1xi32, #tpu.memory_space<vmem>>, vector<16x1xi32>
    %8 = vector.broadcast %7 : vector<16x1xi32> to vector<16x4xi32>
    %9 = arith.cmpi eq, %8, %6 : vector<16x4xi32>
    %cst_7 = arith.constant 1.000000e+00 : f32
    %cst_8 = arith.constant 0.000000e+00 : f32
    %10 = vector.broadcast %cst_7 : f32 to vector<16x4xf32>
    %11 = vector.broadcast %cst_8 : f32 to vector<16x4xf32>
    %12 = arith.select %9, %10, %11 : vector<16x4xi1>, vector<16x4xf32>
    %cst_9 = arith.constant dense<0.000000e+00> : vector<16x8xf32>
    %13 = tpu.matmul %12, %5, %cst_9 {dimension_numbers = #tpu.dot_dimension_numbers<[1], [0], [0], [1], [0, 0, 1, 1], [], []>} : vector<16x4xf32>, vector<4x8xf32>, vector<16x8xf32> -> vector<16x8xf32>
    %c0_10 = arith.constant 0 : index
    %c0_11 = arith.constant 0 : index
    %14 = vector.load %arg3[%c0_10, %c0_11] : memref<8x8xf32, #tpu.memory_space<vmem>>, vector<8x8xf32>
    %c0_12 = arith.constant 0 : index
    %c0_13 = arith.constant 0 : index
    %15 = vector.load %arg5[%c0_12, %c0_13] : memref<8x8xf32, #tpu.memory_space<vmem>>, vector<8x8xf32>
    %c0_14 = arith.constant 0 : index
    %c0_15 = arith.constant 0 : index
    %16 = vector.load %arg6[%c0_14, %c0_15] : memref<8x8xf32, #tpu.memory_space<vmem>>, vector<8x8xf32>
    %17 = tpu.concatenate %15, %16 in 0 : vector<8x8xf32>, vector<8x8xf32> -> vector<16x8xf32>
    %c0_16 = arith.constant 0 : index
    %c0_17 = arith.constant 0 : index
    %18 = vector.load %arg7[%c0_16, %c0_17] : memref<1x8xf32, #tpu.memory_space<vmem>>, vector<1x8xf32>
    %19 = vector.shape_cast %18 : vector<1x8xf32> to vector<1x8xf32>
    %20 = vector.broadcast %19 : vector<1x8xf32> to vector<2x8xf32>
    %cst_18 = arith.constant 0.000000e+00 : f32
    %21 = vector.broadcast %cst_18 : f32 to vector<2x8xf32>
    %cst_19 = arith.constant 0.000000e+00 : f32
    %22 = vector.broadcast %cst_19 : f32 to vector<2x8xf32>
    %23 = vector.extract_strided_slice %13 {offsets = [0, 0], sizes = [2, 8], strides = [1, 1]} : vector<16x8xf32> to vector<2x8xf32>
    %cst_20 = arith.constant dense<0.000000e+00> : vector<2x8xf32>
    %24 = tpu.matmul %21, %14, %cst_20 {dimension_numbers = #tpu.dot_dimension_numbers<[1], [0], [0], [1], [0, 0, 1, 1], [], []>} : vector<2x8xf32>, vector<8x8xf32>, vector<2x8xf32> -> vector<2x8xf32>
    %25 = arith.addf %23, %24 : vector<2x8xf32>
    %26 = math.tanh %25 : vector<2x8xf32>
    %27 = tpu.concatenate %26, %22 in 1 : vector<2x8xf32>, vector<2x8xf32> -> vector<2x16xf32>
    %cst_21 = arith.constant dense<0.000000e+00> : vector<2x8xf32>
    %28 = tpu.matmul %27, %17, %cst_21 {dimension_numbers = #tpu.dot_dimension_numbers<[1], [0], [0], [1], [0, 0, 1, 1], [], []>} : vector<2x16xf32>, vector<16x8xf32>, vector<2x8xf32> -> vector<2x8xf32>
    %29 = arith.addf %28, %20 : vector<2x8xf32>
    %30 = math.tanh %29 : vector<2x8xf32>
    %c0_22 = arith.constant 0 : index
    %c0_23 = arith.constant 0 : index
    %c0_24 = arith.constant 0 : index
    %31 = vector.load %arg11[%c0_22, %c0_23, %c0_24] : memref<2x8x8xf32, #tpu.memory_space<vmem>>, vector<2x1x8xf32>
    %32 = vector.shape_cast %31 : vector<2x1x8xf32> to vector<2x8xf32>
    %33 = vector.shape_cast %30 : vector<2x8xf32> to vector<2x1x8xf32>
    tpu.vector_store %arg11[%c0_22, %c0_23, %c0_24], %33 {strides = array<i32>} : memref<2x8x8xf32, #tpu.memory_space<vmem>>, vector<2x1x8xf32>,
    %34 = vector.extract_strided_slice %13 {offsets = [2, 0], sizes = [2, 8], strides = [1, 1]} : vector<16x8xf32> to vector<2x8xf32>
    %cst_25 = arith.constant dense<0.000000e+00> : vector<2x8xf32>
    %35 = tpu.matmul %26, %14, %cst_25 {dimension_numbers = #tpu.dot_dimension_numbers<[1], [0], [0], [1], [0, 0, 1, 1], [], []>} : vector<2x8xf32>, vector<8x8xf32>, vector<2x8xf32> -> vector<2x8xf32>
    %36 = arith.addf %34, %35 : vector<2x8xf32>
    %37 = math.tanh %36 : vector<2x8xf32>
    %38 = tpu.concatenate %37, %30 in 1 : vector<2x8xf32>, vector<2x8xf32> -> vector<2x16xf32>
    %cst_26 = arith.constant dense<0.000000e+00> : vector<2x8xf32>
    %39 = tpu.matmul %38, %17, %cst_26 {dimension_numbers = #tpu.dot_dimension_numbers<[1], [0], [0], [1], [0, 0, 1, 1], [], []>} : vector<2x16xf32>, vector<16x8xf32>, vector<2x8xf32> -> vector<2x8xf32>
    %40 = arith.addf %39, %20 : vector<2x8xf32>
    %41 = math.tanh %40 : vector<2x8xf32>
    %c0_27 = arith.constant 0 : index
    %c1 = arith.constant 1 : index
    %c0_28 = arith.constant 0 : index
    %42 = vector.load %arg11[%c0_27, %c1, %c0_28] : memref<2x8x8xf32, #tpu.memory_space<vmem>>, vector<2x1x8xf32>
    %43 = vector.shape_cast %42 : vector<2x1x8xf32> to vector<2x8xf32>
    %44 = vector.shape_cast %41 : vector<2x8xf32> to vector<2x1x8xf32>
    tpu.vector_store %arg11[%c0_27, %c1, %c0_28], %44 {strides = array<i32>} : memref<2x8x8xf32, #tpu.memory_space<vmem>>, vector<2x1x8xf32>,
    %45 = vector.extract_strided_slice %13 {offsets = [4, 0], sizes = [2, 8], strides = [1, 1]} : vector<16x8xf32> to vector<2x8xf32>
    %cst_29 = arith.constant dense<0.000000e+00> : vector<2x8xf32>
    %46 = tpu.matmul %37, %14, %cst_29 {dimension_numbers = #tpu.dot_dimension_numbers<[1], [0], [0], [1], [0, 0, 1, 1], [], []>} : vector<2x8xf32>, vector<8x8xf32>, vector<2x8xf32> -> vector<2x8xf32>
    %47 = arith.addf %45, %46 : vector<2x8xf32>
    %48 = math.tanh %47 : vector<2x8xf32>
    %49 = tpu.concatenate %48, %41 in 1 : vector<2x8xf32>, vector<2x8xf32> -> vector<2x16xf32>
    %cst_30 = arith.constant dense<0.000000e+00> : vector<2x8xf32>
    %50 = tpu.matmul %49, %17, %cst_30 {dimension_numbers = #tpu.dot_dimension_numbers<[1], [0], [0], [1], [0, 0, 1, 1], [], []>} : vector<2x16xf32>, vector<16x8xf32>, vector<2x8xf32> -> vector<2x8xf32>
    %51 = arith.addf %50, %20 : vector<2x8xf32>
    %52 = math.tanh %51 : vector<2x8xf32>
    %c0_31 = arith.constant 0 : index
    %c2 = arith.constant 2 : index
    %c0_32 = arith.constant 0 : index
    %53 = vector.load %arg11[%c0_31, %c2, %c0_32] : memref<2x8x8xf32, #tpu.memory_space<vmem>>, vector<2x1x8xf32>
    %54 = vector.shape_cast %53 : vector<2x1x8xf32> to vector<2x8xf32>
    %55 = vector.shape_cast %52 : vector<2x8xf32> to vector<2x1x8xf32>
    tpu.vector_store %arg11[%c0_31, %c2, %c0_32], %55 {strides = array<i32>} : memref<2x8x8xf32, #tpu.memory_space<vmem>>, vector<2x1x8xf32>,
    %56 = vector.extract_strided_slice %13 {offsets = [6, 0], sizes = [2, 8], strides = [1, 1]} : vector<16x8xf32> to vector<2x8xf32>
    %cst_33 = arith.constant dense<0.000000e+00> : vector<2x8xf32>
    %57 = tpu.matmul %48, %14, %cst_33 {dimension_numbers = #tpu.dot_dimension_numbers<[1], [0], [0], [1], [0, 0, 1, 1], [], []>} : vector<2x8xf32>, vector<8x8xf32>, vector<2x8xf32> -> vector<2x8xf32>
    %58 = arith.addf %56, %57 : vector<2x8xf32>
    %59 = math.tanh %58 : vector<2x8xf32>
    %60 = tpu.concatenate %59, %52 in 1 : vector<2x8xf32>, vector<2x8xf32> -> vector<2x16xf32>
    %cst_34 = arith.constant dense<0.000000e+00> : vector<2x8xf32>
    %61 = tpu.matmul %60, %17, %cst_34 {dimension_numbers = #tpu.dot_dimension_numbers<[1], [0], [0], [1], [0, 0, 1, 1], [], []>} : vector<2x16xf32>, vector<16x8xf32>, vector<2x8xf32> -> vector<2x8xf32>
    %62 = arith.addf %61, %20 : vector<2x8xf32>
    %63 = math.tanh %62 : vector<2x8xf32>
    %c0_35 = arith.constant 0 : index
    %c3 = arith.constant 3 : index
    %c0_36 = arith.constant 0 : index
    %64 = vector.load %arg11[%c0_35, %c3, %c0_36] : memref<2x8x8xf32, #tpu.memory_space<vmem>>, vector<2x1x8xf32>
    %65 = vector.shape_cast %64 : vector<2x1x8xf32> to vector<2x8xf32>
    %66 = vector.shape_cast %63 : vector<2x8xf32> to vector<2x1x8xf32>
    tpu.vector_store %arg11[%c0_35, %c3, %c0_36], %66 {strides = array<i32>} : memref<2x8x8xf32, #tpu.memory_space<vmem>>, vector<2x1x8xf32>,
    %67 = vector.extract_strided_slice %13 {offsets = [8, 0], sizes = [2, 8], strides = [1, 1]} : vector<16x8xf32> to vector<2x8xf32>
    %cst_37 = arith.constant dense<0.000000e+00> : vector<2x8xf32>
    %68 = tpu.matmul %59, %14, %cst_37 {dimension_numbers = #tpu.dot_dimension_numbers<[1], [0], [0], [1], [0, 0, 1, 1], [], []>} : vector<2x8xf32>, vector<8x8xf32>, vector<2x8xf32> -> vector<2x8xf32>
    %69 = arith.addf %67, %68 : vector<2x8xf32>
    %70 = math.tanh %69 : vector<2x8xf32>
    %71 = tpu.concatenate %70, %63 in 1 : vector<2x8xf32>, vector<2x8xf32> -> vector<2x16xf32>
    %cst_38 = arith.constant dense<0.000000e+00> : vector<2x8xf32>
    %72 = tpu.matmul %71, %17, %cst_38 {dimension_numbers = #tpu.dot_dimension_numbers<[1], [0], [0], [1], [0, 0, 1, 1], [], []>} : vector<2x16xf32>, vector<16x8xf32>, vector<2x8xf32> -> vector<2x8xf32>
    %73 = arith.addf %72, %20 : vector<2x8xf32>
    %74 = math.tanh %73 : vector<2x8xf32>
    %c0_39 = arith.constant 0 : index
    %c4 = arith.constant 4 : index
    %c0_40 = arith.constant 0 : index
    %75 = vector.load %arg11[%c0_39, %c4, %c0_40] : memref<2x8x8xf32, #tpu.memory_space<vmem>>, vector<2x1x8xf32>
    %76 = vector.shape_cast %75 : vector<2x1x8xf32> to vector<2x8xf32>
    %77 = vector.shape_cast %74 : vector<2x8xf32> to vector<2x1x8xf32>
    tpu.vector_store %arg11[%c0_39, %c4, %c0_40], %77 {strides = array<i32>} : memref<2x8x8xf32, #tpu.memory_space<vmem>>, vector<2x1x8xf32>,
    %78 = vector.extract_strided_slice %13 {offsets = [10, 0], sizes = [2, 8], strides = [1, 1]} : vector<16x8xf32> to vector<2x8xf32>
    %cst_41 = arith.constant dense<0.000000e+00> : vector<2x8xf32>
    %79 = tpu.matmul %70, %14, %cst_41 {dimension_numbers = #tpu.dot_dimension_numbers<[1], [0], [0], [1], [0, 0, 1, 1], [], []>} : vector<2x8xf32>, vector<8x8xf32>, vector<2x8xf32> -> vector<2x8xf32>
    %80 = arith.addf %78, %79 : vector<2x8xf32>
    %81 = math.tanh %80 : vector<2x8xf32>
    %82 = tpu.concatenate %81, %74 in 1 : vector<2x8xf32>, vector<2x8xf32> -> vector<2x16xf32>
    %cst_42 = arith.constant dense<0.000000e+00> : vector<2x8xf32>
    %83 = tpu.matmul %82, %17, %cst_42 {dimension_numbers = #tpu.dot_dimension_numbers<[1], [0], [0], [1], [0, 0, 1, 1], [], []>} : vector<2x16xf32>, vector<16x8xf32>, vector<2x8xf32> -> vector<2x8xf32>
    %84 = arith.addf %83, %20 : vector<2x8xf32>
    %85 = math.tanh %84 : vector<2x8xf32>
    %c0_43 = arith.constant 0 : index
    %c5 = arith.constant 5 : index
    %c0_44 = arith.constant 0 : index
    %86 = vector.load %arg11[%c0_43, %c5, %c0_44] : memref<2x8x8xf32, #tpu.memory_space<vmem>>, vector<2x1x8xf32>
    %87 = vector.shape_cast %86 : vector<2x1x8xf32> to vector<2x8xf32>
    %88 = vector.shape_cast %85 : vector<2x8xf32> to vector<2x1x8xf32>
    tpu.vector_store %arg11[%c0_43, %c5, %c0_44], %88 {strides = array<i32>} : memref<2x8x8xf32, #tpu.memory_space<vmem>>, vector<2x1x8xf32>,
    %89 = vector.extract_strided_slice %13 {offsets = [12, 0], sizes = [2, 8], strides = [1, 1]} : vector<16x8xf32> to vector<2x8xf32>
    %cst_45 = arith.constant dense<0.000000e+00> : vector<2x8xf32>
    %90 = tpu.matmul %81, %14, %cst_45 {dimension_numbers = #tpu.dot_dimension_numbers<[1], [0], [0], [1], [0, 0, 1, 1], [], []>} : vector<2x8xf32>, vector<8x8xf32>, vector<2x8xf32> -> vector<2x8xf32>
    %91 = arith.addf %89, %90 : vector<2x8xf32>
    %92 = math.tanh %91 : vector<2x8xf32>
    %93 = tpu.concatenate %92, %85 in 1 : vector<2x8xf32>, vector<2x8xf32> -> vector<2x16xf32>
    %cst_46 = arith.constant dense<0.000000e+00> : vector<2x8xf32>
    %94 = tpu.matmul %93, %17, %cst_46 {dimension_numbers = #tpu.dot_dimension_numbers<[1], [0], [0], [1], [0, 0, 1, 1], [], []>} : vector<2x16xf32>, vector<16x8xf32>, vector<2x8xf32> -> vector<2x8xf32>
    %95 = arith.addf %94, %20 : vector<2x8xf32>
    %96 = math.tanh %95 : vector<2x8xf32>
    %c0_47 = arith.constant 0 : index
    %c6 = arith.constant 6 : index
    %c0_48 = arith.constant 0 : index
    %97 = vector.load %arg11[%c0_47, %c6, %c0_48] : memref<2x8x8xf32, #tpu.memory_space<vmem>>, vector<2x1x8xf32>
    %98 = vector.shape_cast %97 : vector<2x1x8xf32> to vector<2x8xf32>
    %99 = vector.shape_cast %96 : vector<2x8xf32> to vector<2x1x8xf32>
    tpu.vector_store %arg11[%c0_47, %c6, %c0_48], %99 {strides = array<i32>} : memref<2x8x8xf32, #tpu.memory_space<vmem>>, vector<2x1x8xf32>,
    %100 = vector.extract_strided_slice %13 {offsets = [14, 0], sizes = [2, 8], strides = [1, 1]} : vector<16x8xf32> to vector<2x8xf32>
    %cst_49 = arith.constant dense<0.000000e+00> : vector<2x8xf32>
    %101 = tpu.matmul %92, %14, %cst_49 {dimension_numbers = #tpu.dot_dimension_numbers<[1], [0], [0], [1], [0, 0, 1, 1], [], []>} : vector<2x8xf32>, vector<8x8xf32>, vector<2x8xf32> -> vector<2x8xf32>
    %102 = arith.addf %100, %101 : vector<2x8xf32>
    %103 = math.tanh %102 : vector<2x8xf32>
    %104 = tpu.concatenate %103, %96 in 1 : vector<2x8xf32>, vector<2x8xf32> -> vector<2x16xf32>
    %cst_50 = arith.constant dense<0.000000e+00> : vector<2x8xf32>
    %105 = tpu.matmul %104, %17, %cst_50 {dimension_numbers = #tpu.dot_dimension_numbers<[1], [0], [0], [1], [0, 0, 1, 1], [], []>} : vector<2x16xf32>, vector<16x8xf32>, vector<2x8xf32> -> vector<2x8xf32>
    %106 = arith.addf %105, %20 : vector<2x8xf32>
    %107 = math.tanh %106 : vector<2x8xf32>
    %c0_51 = arith.constant 0 : index
    %c7 = arith.constant 7 : index
    %c0_52 = arith.constant 0 : index
    %108 = vector.load %arg11[%c0_51, %c7, %c0_52] : memref<2x8x8xf32, #tpu.memory_space<vmem>>, vector<2x1x8xf32>
    %109 = vector.shape_cast %108 : vector<2x1x8xf32> to vector<2x8xf32>
    %110 = vector.shape_cast %107 : vector<2x8xf32> to vector<2x1x8xf32>
    tpu.vector_store %arg11[%c0_51, %c7, %c0_52], %110 {strides = array<i32>} : memref<2x8x8xf32, #tpu.memory_space<vmem>>, vector<2x1x8xf32>,
    %c0_53 = arith.constant 0 : index
    %c0_54 = arith.constant 0 : index
    %c0_55 = arith.constant 0 : index
    %111 = vector.load %arg11[%c0_53, %c0_54, %c0_55] : memref<2x8x8xf32, #tpu.memory_space<vmem>>, vector<2x8x8xf32>
    %112 = vector.shape_cast %111 : vector<2x8x8xf32> to vector<16x8xf32>
    %c0_56 = arith.constant 0 : index
    %c0_57 = arith.constant 0 : index
    %113 = vector.load %arg8[%c0_56, %c0_57] : memref<8x4xf32, #tpu.memory_space<vmem>>, vector<8x4xf32>
    %cst_58 = arith.constant dense<0.000000e+00> : vector<16x4xf32>
    %114 = tpu.matmul %112, %113, %cst_58 {dimension_numbers = #tpu.dot_dimension_numbers<[1], [0], [0], [1], [0, 0, 1, 1], [], []>} : vector<16x8xf32>, vector<8x4xf32>, vector<16x4xf32> -> vector<16x4xf32>
    %c0_59 = arith.constant 0 : index
    %c0_60 = arith.constant 0 : index
    %115 = vector.load %arg9[%c0_59, %c0_60] : memref<1x4xf32, #tpu.memory_space<vmem>>, vector<1x4xf32>
    %116 = vector.broadcast %115 : vector<1x4xf32> to vector<16x4xf32>
    %117 = arith.addf %114, %116 : vector<16x4xf32>
    %c0_61 = arith.constant 0 : index
    %c0_62 = arith.constant 0 : index
    %118 = vector.load %arg10[%c0_61, %c0_62] : memref<16x4xf32, #tpu.memory_space<vmem>>, vector<16x4xf32>
    tpu.vector_store %arg10[%c0_61, %c0_62], %117 {strides = array<i32>} : memref<16x4xf32, #tpu.memory_space<vmem>>, vector<16x4xf32>,
    return
  }
}

</mosaic_0001>

<llo_original>
// kernel: model_forward.1
$region0: #{model_forward.1}
  #allocation0 [shape = 'u32[]', space=smem, size = 0x4, offset = 0x4, fixed_abs, tag = 'smem constant byte address 0x4 - core index']
  #allocation1 [shape = 'u32[144,128]{1,0:T(1,128)}', space=vmem, size = 0x12000, scoped, tag = 'internal scratch']
  #allocation2 [shape = 'f32[2,8,8]{2,1,0:T(8,128)}', space=vmem, size = 0x2000, scoped, tag = 'scratch operand']
  %s0 = inlined_call_operand.vmem [shape: s32[16,1], index: 0, kind: input, shape index: {}]
  %s1 = inlined_call_operand.vmem [shape: f32[4,10], index: 1, kind: input, shape index: {}]
  %s2 = inlined_call_operand.vmem [shape: f32[10,8], index: 2, kind: input, shape index: {}]
  %s3 = inlined_call_operand.vmem [shape: f32[8,8], index: 3, kind: input, shape index: {}]
  %s4 = inlined_call_operand.vmem [shape: f32[1,8], index: 4, kind: input, shape index: {}]
  %s5 = inlined_call_operand.vmem [shape: f32[8,8], index: 5, kind: input, shape index: {}]
  %s6 = inlined_call_operand.vmem [shape: f32[8,8], index: 6, kind: input, shape index: {}]
  %s7 = inlined_call_operand.vmem [shape: f32[1,8], index: 7, kind: input, shape index: {}]
  %s8 = inlined_call_operand.vmem [shape: f32[8,4], index: 8, kind: input, shape index: {}]
  %s9 = inlined_call_operand.vmem [shape: f32[1,4], index: 9, kind: input, shape index: {}]
  %s10 = inlined_call_operand.vmem [shape: f32[16,4], index: 10, kind: output, shape index: {}]
  %s11 = sld [smem:[#allocation0]]
  $region50: #{model_forward.1} parent=0
    _
  %s13 = ssub.s32 1, %s11
  %s14 = scalar_select 0, %s13, %s11
  // Predicated region
  $region2: #{model_forward.1} parent=0 // pred_check
    _
  $region3: #{model_forward.1} parent=0 // pred_check_branch
    %16 = sbr.rel (0) target = $region5
  $region4: #{model_forward.1} parent=0 // pred_region
    _
  $region5: #{model_forward.1} parent=0 // pred_fallthru
    _
  // Predicated region
  $region6: #{model_forward.1} parent=0 // pred_check
    _
  $region7: #{model_forward.1} parent=0 // pred_check_branch
    %18 = sbr.rel (0) target = $region9
  $region8: #{model_forward.1} parent=0 // pred_region
    _
  $region9: #{model_forward.1} parent=0 // pred_fallthru
    _
  // Predicated region
  $region10: #{model_forward.1} parent=0 // pred_check
    _
  $region11: #{model_forward.1} parent=0 // pred_check_branch
    %20 = sbr.rel (0) target = $region13
  $region12: #{model_forward.1} parent=0 // pred_region
    _
  $region13: #{model_forward.1} parent=0 // pred_fallthru
    _
  // Predicated region
  $region14: #{model_forward.1} parent=0 // pred_check
    _
  $region15: #{model_forward.1} parent=0 // pred_check_branch
    %22 = sbr.rel (0) target = $region17
  $region16: #{model_forward.1} parent=0 // pred_region
    _
  $region17: #{model_forward.1} parent=0 // pred_fallthru
    _
  // Predicated region
  $region18: #{model_forward.1} parent=0 // pred_check
    _
  $region19: #{model_forward.1} parent=0 // pred_check_branch
    %24 = sbr.rel (0) target = $region21
  $region20: #{model_forward.1} parent=0 // pred_region
    _
  $region21: #{model_forward.1} parent=0 // pred_fallthru
    _
  // Predicated region
  $region22: #{model_forward.1} parent=0 // pred_check
    _
  $region23: #{model_forward.1} parent=0 // pred_check_branch
    %26 = sbr.rel (0) target = $region25
  $region24: #{model_forward.1} parent=0 // pred_region
    _
  $region25: #{model_forward.1} parent=0 // pred_fallthru
    _
  // Predicated region
  $region26: #{model_forward.1} parent=0 // pred_check
    _
  $region27: #{model_forward.1} parent=0 // pred_check_branch
    %28 = sbr.rel (0) target = $region29
  $region28: #{model_forward.1} parent=0 // pred_region
    _
  $region29: #{model_forward.1} parent=0 // pred_fallthru
    _
  // Predicated region
  $region30: #{model_forward.1} parent=0 // pred_check
    _
  $region31: #{model_forward.1} parent=0 // pred_check_branch
    %30 = sbr.rel (0) target = $region33
  $region32: #{model_forward.1} parent=0 // pred_region
    _
  $region33: #{model_forward.1} parent=0 // pred_fallthru
    _
  // Predicated region
  $region34: #{model_forward.1} parent=0 // pred_check
    _
  $region35: #{model_forward.1} parent=0 // pred_check_branch
    %32 = sbr.rel (0) target = $region37
  $region36: #{model_forward.1} parent=0 // pred_region
    _
  $region37: #{model_forward.1} parent=0 // pred_fallthru
    _
  // Predicated region
  $region38: #{model_forward.1} parent=0 // pred_check
    _
  $region39: #{model_forward.1} parent=0 // pred_check_branch
    %34 = sbr.rel (0) target = $region41
  $region40: #{model_forward.1} parent=0 // pred_region
    _
  $region41: #{model_forward.1} parent=0 // pred_fallthru
    _
  %v35 = vld [vmem:[%s1] sm:$0xf]
  %v36 = vld [vmem:[%s2] sm:$0xff]
  %v37 = vld [vmem:[%s2 + $0x8] sm:$0x3]
  %v38 = vld [vmem:[%s4] sm:$0x1]
  %v40 = vlaneseq
  %v41 = vshrl.u32 %v40, 7
  %v42 = vsub.s32 0, %v41
  %v43 = vrot.slane %v38, %v42
  %vm45 = vcmask 80896
  %v47 = vsel %vm45, %v35, 0
  %vm49 = vcmask 1041408
  %v51 = vsel %vm49, %v37, 0
  %53 = vmatprep.subr.mxu0 0.0
  %54 = vmatpush1.msra.mxu0 %v36
  %55 = vmatprep.subr.mxu0 0.0
  %56 = vmatpush1.msra.mxu0 %v51
  %57 = vmatprep.subr.mxu0 0.0
  %58 = vmatpush1.msra.mxu0 0.0
  %59 = vmatprep.subr.mxu0 0.0
  %60 = vmatpush1.msra.mxu0 0.0
  %61 = vmatprep.subr.mxu0 0.0
  %62 = vmatpush1.msra.mxu0 0.0
  %63 = vmatprep.subr.mxu0 0.0
  %64 = vmatpush1.msra.mxu0 0.0
  %65 = vmatprep.subr.mxu0 0.0
  %66 = vmatpush1.msra.mxu0 0.0
  %67 = vmatprep.subr.mxu0 0.0
  %68 = vmatpush1.msra.mxu0 0.0
  %69 = vmatprep.subr.mxu0 0.0
  %70 = vmatpush1.msra.mxu0 0.0
  %71 = vmatprep.subr.mxu0 0.0
  %72 = vmatpush1.msra.mxu0 0.0
  %73 = vmatprep.subr.mxu0 0.0
  %74 = vmatpush1.msra.mxu0 0.0
  %75 = vmatprep.subr.mxu0 0.0
  %76 = vmatpush1.msra.mxu0 0.0
  %77 = vmatprep.subr.mxu0 0.0
  %78 = vmatpush1.msra.mxu0 0.0
  %79 = vmatprep.subr.mxu0 0.0
  %80 = vmatpush1.msra.mxu0 0.0
  %81 = vmatprep.subr.mxu0 0.0
  %82 = vmatpush1.msra.mxu0 0.0
  %83 = vmatprep.subr.mxu0 0.0
  %84 = vmatpush1.msra.mxu0 0.0
  %85 = vmatprep.subr.mxu0 0.0
  %86 = vmatpush1.msra.mxu0 0.0
  %87 = vmatprep.subr.mxu0 0.0
  %88 = vmatpush1.msra.mxu0 0.0
  %89 = vmatprep.subr.mxu0 0.0
  %90 = vmatpush1.msra.mxu0 0.0
  %91 = vmatprep.subr.mxu0 0.0
  %92 = vmatpush1.msra.mxu0 0.0
  %93 = vmatprep.subr.mxu0 0.0
  %94 = vmatpush1.msra.mxu0 0.0
  %95 = vmatprep.subr.mxu0 0.0
  %96 = vmatpush1.msra.mxu0 0.0
  %97 = vmatprep.subr.mxu0 0.0
  %98 = vmatpush1.msra.mxu0 0.0
  %99 = vmatprep.subr.mxu0 0.0
  %100 = vmatpush1.msra.mxu0 0.0
  %101 = vmatprep.subr.mxu0 0.0
  %102 = vmatpush1.msra.mxu0 0.0
  %103 = vmatprep.subr.mxu0 0.0
  %104 = vmatpush1.msra.mxu0 0.0
  %105 = vmatprep.subr.mxu0 0.0
  %106 = vmatpush1.msra.mxu0 0.0
  %107 = vmatprep.subr.mxu0 0.0
  %108 = vmatpush1.msra.mxu0 0.0
  %109 = vmatprep.subr.mxu0 0.0
  %110 = vmatpush1.msra.mxu0 0.0
  %111 = vmatprep.subr.mxu0 0.0
  %112 = vmatpush1.msra.mxu0 0.0
  %113 = vmatprep.subr.mxu0 0.0
  %114 = vmatpush1.msra.mxu0 0.0
  %115 = vmatprep.subr.mxu0 0.0
  %116 = vmatpush1.msra.mxu0 0.0
  %117 = vmatprep.mubr.f32.mxu0 0.0
  %118 = vmatmul.mubr.f32.gmra.mrb[0].mxu0 %v47
  %v119 = vpop.f32.mrb[0].mxu0
  %v120 = vadd.f32 %v43, %v119
  %v121 = vpop.f32.mrb[0].mxu0
  %122 = vdwg.mxu0
  %v123 = vlaneseq
  %v124 = vand.u32 %v123, 127
  %v125 = vld [vmem:[%s0] sm:$0xff]
  %v126 = vld [vmem:[%s0 + $0x8] sm:$0xff]
  %127 = vset.pattern.permute.xlu0 0
  %128 = vperm.xlu0 %127, %v125
  %v129 = vpop.permute.xlu0 %128
  %130 = vset.pattern.permute.xlu0 0
  %131 = vperm.xlu0 %130, %v126
  %v132 = vpop.permute.xlu0 %131
  %vm133 = vcmp.eq.s32.totalorder %v129, %v124
  %vm134 = vcmp.eq.s32.totalorder %v132, %v124
  %v135 = vsel %vm133, 1.0, 0.0
  %v136 = vsel %vm134, 1.0, 0.0
  %vm137 = vcmask 31744
  %v139 = vsel %vm137, %v135, 0
  %v142 = vsel %vm137, %v136, 0
  %vm144 = vcmask 1043456
  %v146 = vsel %vm144, %v120, 0
  %148 = vmatprep.subr.mxu0 0.0
  %149 = vmatpush1.msra.mxu0 %v146
  %150 = vmatprep.subr.mxu0 0.0
  %151 = vmatpush1.msra.mxu0 0.0
  %152 = vmatprep.subr.mxu0 0.0
  %153 = vmatpush1.msra.mxu0 0.0
  %154 = vmatprep.subr.mxu0 0.0
  %155 = vmatpush1.msra.mxu0 0.0
  %156 = vmatprep.subr.mxu0 0.0
  %157 = vmatpush1.msra.mxu0 0.0
  %158 = vmatprep.subr.mxu0 0.0
  %159 = vmatpush1.msra.mxu0 0.0
  %160 = vmatprep.subr.mxu0 0.0
  %161 = vmatpush1.msra.mxu0 0.0
  %162 = vmatprep.subr.mxu0 0.0
  %163 = vmatpush1.msra.mxu0 0.0
  %164 = vmatprep.subr.mxu0 0.0
  %165 = vmatpush1.msra.mxu0 0.0
  %166 = vmatprep.subr.mxu0 0.0
  %167 = vmatpush1.msra.mxu0 0.0
  %168 = vmatprep.subr.mxu0 0.0
  %169 = vmatpush1.msra.mxu0 0.0
  %170 = vmatprep.subr.mxu0 0.0
  %171 = vmatpush1.msra.mxu0 0.0
  %172 = vmatprep.subr.mxu0 0.0
  %173 = vmatpush1.msra.mxu0 0.0
  %174 = vmatprep.subr.mxu0 0.0
  %175 = vmatpush1.msra.mxu0 0.0
  %176 = vmatprep.subr.mxu0 0.0
  %177 = vmatpush1.msra.mxu0 0.0
  %178 = vmatprep.subr.mxu0 0.0
  %179 = vmatpush1.msra.mxu0 0.0
  %180 = vmatprep.subr.mxu0 0.0
  %181 = vmatpush1.msra.mxu0 0.0
  %182 = vmatprep.subr.mxu0 0.0
  %183 = vmatpush1.msra.mxu0 0.0
  %184 = vmatprep.subr.mxu0 0.0
  %185 = vmatpush1.msra.mxu0 0.0
  %186 = vmatprep.subr.mxu0 0.0
  %187 = vmatpush1.msra.mxu0 0.0
  %188 = vmatprep.subr.mxu0 0.0
  %189 = vmatpush1.msra.mxu0 0.0
  %190 = vmatprep.subr.mxu0 0.0
  %191 = vmatpush1.msra.mxu0 0.0
  %192 = vmatprep.subr.mxu0 0.0
  %193 = vmatpush1.msra.mxu0 0.0
  %194 = vmatprep.subr.mxu0 0.0
  %195 = vmatpush1.msra.mxu0 0.0
  %196 = vmatprep.subr.mxu0 0.0
  %197 = vmatpush1.msra.mxu0 0.0
  %198 = vmatprep.subr.mxu0 0.0
  %199 = vmatpush1.msra.mxu0 0.0
  %200 = vmatprep.subr.mxu0 0.0
  %201 = vmatpush1.msra.mxu0 0.0
  %202 = vmatprep.subr.mxu0 0.0
  %203 = vmatpush1.msra.mxu0 0.0
  %204 = vmatprep.subr.mxu0 0.0
  %205 = vmatpush1.msra.mxu0 0.0
  %206 = vmatprep.subr.mxu0 0.0
  %207 = vmatpush1.msra.mxu0 0.0
  %208 = vmatprep.subr.mxu0 0.0
  %209 = vmatpush1.msra.mxu0 0.0
  %210 = vmatprep.subr.mxu0 0.0
  %211 = vmatpush1.msra.mxu0 0.0
  %212 = vmatprep.mubr.f32.mxu0 0.0
  %213 = vmatmul.mubr.f32.gmra.mrb[0].mxu0 %v139
  %v214 = vpop.f32.mrb[0].mxu0
  %v215 = vadd.f32 0.0, %v214
  %v216 = vpop.f32.mrb[0].mxu0
  %217 = vmatprep.mubr.f32.mxu0 0.0
  %218 = vmatmul.mubr.f32.gmra.mrb[0].mxu0 %v142
  %v219 = vpop.f32.mrb[0].mxu0
  %v220 = vadd.f32 0.0, %v219
  %v221 = vpop.f32.mrb[0].mxu0
  %222 = vdwg.mxu0
  %v223 = vld [vmem:[%s3] sm:$0xff]
  %v224 = vld [vmem:[%s5] sm:$0xff]
  %v225 = vld [vmem:[%s6] sm:$0xff]
  %v226 = vld [vmem:[%s7] sm:$0x1]
  %v228 = vlaneseq
  %v229 = vshrl.u32 %v228, 7
  %v230 = vsub.s32 0, %v229
  %v231 = vrot.slane %v226, %v230
  %vm233 = vcmask 64512
  %v235 = vsel %vm233, 0.0, 0
  %237 = vmatprep.subr.mxu0 0.0
  %238 = vmatpush1.msra.mxu0 %v223
  %239 = vmatprep.subr.mxu0 0.0
  %240 = vmatpush1.msra.mxu0 0.0
  %241 = vmatprep.subr.mxu0 0.0
  %242 = vmatpush1.msra.mxu0 0.0
  %243 = vmatprep.subr.mxu0 0.0
  %244 = vmatpush1.msra.mxu0 0.0
  %245 = vmatprep.subr.mxu0 0.0
  %246 = vmatpush1.msra.mxu0 0.0
  %247 = vmatprep.subr.mxu0 0.0
  %248 = vmatpush1.msra.mxu0 0.0
  %249 = vmatprep.subr.mxu0 0.0
  %250 = vmatpush1.msra.mxu0 0.0
  %251 = vmatprep.subr.mxu0 0.0
  %252 = vmatpush1.msra.mxu0 0.0
  %253 = vmatprep.subr.mxu0 0.0
  %254 = vmatpush1.msra.mxu0 0.0
  %255 = vmatprep.subr.mxu0 0.0
  %256 = vmatpush1.msra.mxu0 0.0
  %257 = vmatprep.subr.mxu0 0.0
  %258 = vmatpush1.msra.mxu0 0.0
  %259 = vmatprep.subr.mxu0 0.0
  %260 = vmatpush1.msra.mxu0 0.0
  %261 = vmatprep.subr.mxu0 0.0
  %262 = vmatpush1.msra.mxu0 0.0
  %263 = vmatprep.subr.mxu0 0.0
  %264 = vmatpush1.msra.mxu0 0.0
  %265 = vmatprep.subr.mxu0 0.0
  %266 = vmatpush1.msra.mxu0 0.0
  %267 = vmatprep.subr.mxu0 0.0
  %268 = vmatpush1.msra.mxu0 0.0
  %269 = vmatprep.subr.mxu0 0.0
  %270 = vmatpush1.msra.mxu0 0.0
  %271 = vmatprep.subr.mxu0 0.0
  %272 = vmatpush1.msra.mxu0 0.0
  %273 = vmatprep.subr.mxu0 0.0
  %274 = vmatpush1.msra.mxu0 0.0
  %275 = vmatprep.subr.mxu0 0.0
  %276 = vmatpush1.msra.mxu0 0.0
  %277 = vmatprep.subr.mxu0 0.0
  %278 = vmatpush1.msra.mxu0 0.0
  %279 = vmatprep.subr.mxu0 0.0
  %280 = vmatpush1.msra.mxu0 0.0
  %281 = vmatprep.subr.mxu0 0.0
  %282 = vmatpush1.msra.mxu0 0.0
  %283 = vmatprep.subr.mxu0 0.0
  %284 = vmatpush1.msra.mxu0 0.0
  %285 = vmatprep.subr.mxu0 0.0
  %286 = vmatpush1.msra.mxu0 0.0
  %287 = vmatprep.subr.mxu0 0.0
  %288 = vmatpush1.msra.mxu0 0.0
  %289 = vmatprep.subr.mxu0 0.0
  %290 = vmatpush1.msra.mxu0 0.0
  %291 = vmatprep.subr.mxu0 0.0
  %292 = vmatpush1.msra.mxu0 0.0
  %293 = vmatprep.subr.mxu0 0.0
  %294 = vmatpush1.msra.mxu0 0.0
  %295 = vmatprep.subr.mxu0 0.0
  %296 = vmatpush1.msra.mxu0 0.0
  %297 = vmatprep.subr.mxu0 0.0
  %298 = vmatpush1.msra.mxu0 0.0
  %299 = vmatprep.subr.mxu0 0.0
  %300 = vmatpush1.msra.mxu0 0.0
  %301 = vmatprep.mubr.f32.mxu0 0.0
  %302 = vmatmul.mubr.f32.gmra.mrb[0].mxu0 %v235
  %v303 = vpop.f32.mrb[0].mxu0
  %v304 = vadd.f32 0.0, %v303
  %v305 = vpop.f32.mrb[0].mxu0
  %306 = vdwg.mxu0
  %v307 = vadd.f32 %v215, %v304
  %v308 = vtanh.pop %v307
  %v309 = vsel %vm233, %v308, 0.0
  %vm310 = vcmask 130048
  %v312 = vsel %vm310, %v309, 0
  %314 = vmatprep.subr.mxu0 0.0
  %315 = vmatpush1.msra.mxu0 %v224
  %316 = vmatprep.subr.mxu0 0.0
  %317 = vmatpush1.msra.mxu0 %v225
  %318 = vmatprep.subr.mxu0 0.0
  %319 = vmatpush1.msra.mxu0 0.0
  %320 = vmatprep.subr.mxu0 0.0
  %321 = vmatpush1.msra.mxu0 0.0
  %322 = vmatprep.subr.mxu0 0.0
  %323 = vmatpush1.msra.mxu0 0.0
  %324 = vmatprep.subr.mxu0 0.0
  %325 = vmatpush1.msra.mxu0 0.0
  %326 = vmatprep.subr.mxu0 0.0
  %327 = vmatpush1.msra.mxu0 0.0
  %328 = vmatprep.subr.mxu0 0.0
  %329 = vmatpush1.msra.mxu0 0.0
  %330 = vmatprep.subr.mxu0 0.0
  %331 = vmatpush1.msra.mxu0 0.0
  %332 = vmatprep.subr.mxu0 0.0
  %333 = vmatpush1.msra.mxu0 0.0
  %334 = vmatprep.subr.mxu0 0.0
  %335 = vmatpush1.msra.mxu0 0.0
  %336 = vmatprep.subr.mxu0 0.0
  %337 = vmatpush1.msra.mxu0 0.0
  %338 = vmatprep.subr.mxu0 0.0
  %339 = vmatpush1.msra.mxu0 0.0
  %340 = vmatprep.subr.mxu0 0.0
  %341 = vmatpush1.msra.mxu0 0.0
  %342 = vmatprep.subr.mxu0 0.0
  %343 = vmatpush1.msra.mxu0 0.0
  %344 = vmatprep.subr.mxu0 0.0
  %345 = vmatpush1.msra.mxu0 0.0
  %346 = vmatprep.subr.mxu0 0.0
  %347 = vmatpush1.msra.mxu0 0.0
  %348 = vmatprep.subr.mxu0 0.0
  %349 = vmatpush1.msra.mxu0 0.0
  %350 = vmatprep.subr.mxu0 0.0
  %351 = vmatpush1.msra.mxu0 0.0
  %352 = vmatprep.subr.mxu0 0.0
  %353 = vmatpush1.msra.mxu0 0.0
  %354 = vmatprep.subr.mxu0 0.0
  %355 = vmatpush1.msra.mxu0 0.0
  %356 = vmatprep.subr.mxu0 0.0
  %357 = vmatpush1.msra.mxu0 0.0
  %358 = vmatprep.subr.mxu0 0.0
  %359 = vmatpush1.msra.mxu0 0.0
  %360 = vmatprep.subr.mxu0 0.0
  %361 = vmatpush1.msra.mxu0 0.0
  %362 = vmatprep.subr.mxu0 0.0
  %363 = vmatpush1.msra.mxu0 0.0
  %364 = vmatprep.subr.mxu0 0.0
  %365 = vmatpush1.msra.mxu0 0.0
  %366 = vmatprep.subr.mxu0 0.0
  %367 = vmatpush1.msra.mxu0 0.0
  %368 = vmatprep.subr.mxu0 0.0
  %369 = vmatpush1.msra.mxu0 0.0
  %370 = vmatprep.subr.mxu0 0.0
  %371 = vmatpush1.msra.mxu0 0.0
  %372 = vmatprep.subr.mxu0 0.0
  %373 = vmatpush1.msra.mxu0 0.0
  %374 = vmatprep.subr.mxu0 0.0
  %375 = vmatpush1.msra.mxu0 0.0
  %376 = vmatprep.subr.mxu0 0.0
  %377 = vmatpush1.msra.mxu0 0.0
  %378 = vmatprep.mubr.f32.mxu0 0.0
  %379 = vmatmul.mubr.f32.gmra.mrb[0].mxu0 %v312
  %v380 = vpop.f32.mrb[0].mxu0
  %v381 = vadd.f32 %v231, %v380
  %v382 = vpop.f32.mrb[0].mxu0
  %383 = vdwg.mxu0
  %v384 = vtanh.pop %v381
  %v387 = vunpack.c.l.s4 1966171168
  %v388 = vunpack.c.0.s8 %v387
  %v389 = vlaneseq
  %v390 = vshrl.u32 %v389, 7
  %v391 = vsub.s32 %v388, %v390
  %v392 = vrot.slane %v384, %v391
  %v393 = vcombine.high %v392, %v392
  %v395 = vunpack.c.l.s4 1966171168
  %v396 = vunpack.c.0.s8 %v395
  %v397 = vlaneseq
  %v398 = vshrl.u32 %v397, 7
  %v399 = vsub.s32 %v396, %v398
  %v400 = vrot.slane %v392, %v399
  %v402 = vunpack.c.l.s4 1966171168
  %v403 = vunpack.c.0.s8 %v402
  %v404 = vlaneseq
  %v405 = vshrl.u32 %v404, 7
  %v406 = vsub.s32 %v403, %v405
  %v407 = vrot.slane %v393, %v406
  %vm410 = vcmask 57344
  %411 = vst.msk [vmem:[#allocation2] sm:$0x1] %vm410, %v400
  %412 = vst.msk [vmem:[#allocation2 + $0x8] sm:$0x1] %vm410, %v407
  %v414 = vsel %vm233, %v308, 0
  %416 = vmatprep.subr.mxu0 0.0
  %417 = vmatpush1.msra.mxu0 %v223
  %418 = vmatprep.subr.mxu0 0.0
  %419 = vmatpush1.msra.mxu0 0.0
  %420 = vmatprep.subr.mxu0 0.0
  %421 = vmatpush1.msra.mxu0 0.0
  %422 = vmatprep.subr.mxu0 0.0
  %423 = vmatpush1.msra.mxu0 0.0
  %424 = vmatprep.subr.mxu0 0.0
  %425 = vmatpush1.msra.mxu0 0.0
  %426 = vmatprep.subr.mxu0 0.0
  %427 = vmatpush1.msra.mxu0 0.0
  %428 = vmatprep.subr.mxu0 0.0
  %429 = vmatpush1.msra.mxu0 0.0
  %430 = vmatprep.subr.mxu0 0.0
  %431 = vmatpush1.msra.mxu0 0.0
  %432 = vmatprep.subr.mxu0 0.0
  %433 = vmatpush1.msra.mxu0 0.0
  %434 = vmatprep.subr.mxu0 0.0
  %435 = vmatpush1.msra.mxu0 0.0
  %436 = vmatprep.subr.mxu0 0.0
  %437 = vmatpush1.msra.mxu0 0.0
  %438 = vmatprep.subr.mxu0 0.0
  %439 = vmatpush1.msra.mxu0 0.0
  %440 = vmatprep.subr.mxu0 0.0
  %441 = vmatpush1.msra.mxu0 0.0
  %442 = vmatprep.subr.mxu0 0.0
  %443 = vmatpush1.msra.mxu0 0.0
  %444 = vmatprep.subr.mxu0 0.0
  %445 = vmatpush1.msra.mxu0 0.0
  %446 = vmatprep.subr.mxu0 0.0
  %447 = vmatpush1.msra.mxu0 0.0
  %448 = vmatprep.subr.mxu0 0.0
  %449 = vmatpush1.msra.mxu0 0.0
  %450 = vmatprep.subr.mxu0 0.0
  %451 = vmatpush1.msra.mxu0 0.0
  %452 = vmatprep.subr.mxu0 0.0
  %453 = vmatpush1.msra.mxu0 0.0
  %454 = vmatprep.subr.mxu0 0.0
  %455 = vmatpush1.msra.mxu0 0.0
  %456 = vmatprep.subr.mxu0 0.0
  %457 = vmatpush1.msra.mxu0 0.0
  %458 = vmatprep.subr.mxu0 0.0
  %459 = vmatpush1.msra.mxu0 0.0
  %460 = vmatprep.subr.mxu0 0.0
  %461 = vmatpush1.msra.mxu0 0.0
  %462 = vmatprep.subr.mxu0 0.0
  %463 = vmatpush1.msra.mxu0 0.0
  %464 = vmatprep.subr.mxu0 0.0
  %465 = vmatpush1.msra.mxu0 0.0
  %466 = vmatprep.subr.mxu0 0.0
  %467 = vmatpush1.msra.mxu0 0.0
  %468 = vmatprep.subr.mxu0 0.0
  %469 = vmatpush1.msra.mxu0 0.0
  %470 = vmatprep.subr.mxu0 0.0
  %471 = vmatpush1.msra.mxu0 0.0
  %472 = vmatprep.subr.mxu0 0.0
  %473 = vmatpush1.msra.mxu0 0.0
  %474 = vmatprep.subr.mxu0 0.0
  %475 = vmatpush1.msra.mxu0 0.0
  %476 = vmatprep.subr.mxu0 0.0
  %477 = vmatpush1.msra.mxu0 0.0
  %478 = vmatprep.subr.mxu0 0.0
  %479 = vmatpush1.msra.mxu0 0.0
  %480 = vmatprep.mubr.f32.mxu0 0.0
  %481 = vmatmul.mubr.f32.gmra.mrb[0].mxu0 %v414
  %v482 = vpop.f32.mrb[0].mxu0
  %v483 = vadd.f32 0.0, %v482
  %v484 = vpop.f32.mrb[0].mxu0
  %485 = vdwg.mxu0
  %v487 = vrot.slane %v483, 6
  %v489 = vadd.f32 %v215, %v487
  %v490 = vtanh.pop %v489
  %v491 = vrot.slane %v384, 6
  %492 = vrot.lane.b32.xlu0 %v491, 8
  %v493 = vpop.permute.xlu0 %492
  %v495 = vsel %vm233, %v490, %v493
  %v497 = vrot.slane %v495, 2
  %v498 = vsel %vm310, %v497, 0
  %500 = vmatprep.subr.mxu0 0.0
  %501 = vmatpush1.msra.mxu0 %v224
  %502 = vmatprep.subr.mxu0 0.0
  %503 = vmatpush1.msra.mxu0 %v225
  %504 = vmatprep.subr.mxu0 0.0
  %505 = vmatpush1.msra.mxu0 0.0
  %506 = vmatprep.subr.mxu0 0.0
  %507 = vmatpush1.msra.mxu0 0.0
  %508 = vmatprep.subr.mxu0 0.0
  %509 = vmatpush1.msra.mxu0 0.0
  %510 = vmatprep.subr.mxu0 0.0
  %511 = vmatpush1.msra.mxu0 0.0
  %512 = vmatprep.subr.mxu0 0.0
  %513 = vmatpush1.msra.mxu0 0.0
  %514 = vmatprep.subr.mxu0 0.0
  %515 = vmatpush1.msra.mxu0 0.0
  %516 = vmatprep.subr.mxu0 0.0
  %517 = vmatpush1.msra.mxu0 0.0
  %518 = vmatprep.subr.mxu0 0.0
  %519 = vmatpush1.msra.mxu0 0.0
  %520 = vmatprep.subr.mxu0 0.0
  %521 = vmatpush1.msra.mxu0 0.0
  %522 = vmatprep.subr.mxu0 0.0
  %523 = vmatpush1.msra.mxu0 0.0
  %524 = vmatprep.subr.mxu0 0.0
  %525 = vmatpush1.msra.mxu0 0.0
  %526 = vmatprep.subr.mxu0 0.0
  %527 = vmatpush1.msra.mxu0 0.0
  %528 = vmatprep.subr.mxu0 0.0
  %529 = vmatpush1.msra.mxu0 0.0
  %530 = vmatprep.subr.mxu0 0.0
  %531 = vmatpush1.msra.mxu0 0.0
  %532 = vmatprep.subr.mxu0 0.0
  %533 = vmatpush1.msra.mxu0 0.0
  %534 = vmatprep.subr.mxu0 0.0
  %535 = vmatpush1.msra.mxu0 0.0
  %536 = vmatprep.subr.mxu0 0.0
  %537 = vmatpush1.msra.mxu0 0.0
  %538 = vmatprep.subr.mxu0 0.0
  %539 = vmatpush1.msra.mxu0 0.0
  %540 = vmatprep.subr.mxu0 0.0
  %541 = vmatpush1.msra.mxu0 0.0
  %542 = vmatprep.subr.mxu0 0.0
  %543 = vmatpush1.msra.mxu0 0.0
  %544 = vmatprep.subr.mxu0 0.0
  %545 = vmatpush1.msra.mxu0 0.0
  %546 = vmatprep.subr.mxu0 0.0
  %547 = vmatpush1.msra.mxu0 0.0
  %548 = vmatprep.subr.mxu0 0.0
  %549 = vmatpush1.msra.mxu0 0.0
  %550 = vmatprep.subr.mxu0 0.0
  %551 = vmatpush1.msra.mxu0 0.0
  %552 = vmatprep.subr.mxu0 0.0
  %553 = vmatpush1.msra.mxu0 0.0
  %554 = vmatprep.subr.mxu0 0.0
  %555 = vmatpush1.msra.mxu0 0.0
  %556 = vmatprep.subr.mxu0 0.0
  %557 = vmatpush1.msra.mxu0 0.0
  %558 = vmatprep.subr.mxu0 0.0
  %559 = vmatpush1.msra.mxu0 0.0
  %560 = vmatprep.subr.mxu0 0.0
  %561 = vmatpush1.msra.mxu0 0.0
  %562 = vmatprep.subr.mxu0 0.0
  %563 = vmatpush1.msra.mxu0 0.0
  %564 = vmatprep.mubr.f32.mxu0 0.0
  %565 = vmatmul.mubr.f32.gmra.mrb[0].mxu0 %v498
  %v566 = vpop.f32.mrb[0].mxu0
  %v567 = vadd.f32 %v231, %v566
  %v568 = vpop.f32.mrb[0].mxu0
  %569 = vdwg.mxu0
  %v570 = vtanh.pop %v567
  %v573 = vunpack.c.l.s4 1966171168
  %v574 = vunpack.c.0.s8 %v573
  %v575 = vlaneseq
  %v576 = vshrl.u32 %v575, 7
  %v577 = vsub.s32 %v574, %v576
  %v578 = vrot.slane %v570, %v577
  %v579 = vcombine.high %v578, %v578
  %v581 = vunpack.c.l.s4 1966171168
  %v582 = vunpack.c.0.s8 %v581
  %v583 = vlaneseq
  %v584 = vshrl.u32 %v583, 7
  %v585 = vsub.s32 %v582, %v584
  %v586 = vrot.slane %v578, %v585
  %v588 = vunpack.c.l.s4 1966171168
  %v589 = vunpack.c.0.s8 %v588
  %v590 = vlaneseq
  %v591 = vshrl.u32 %v590, 7
  %v592 = vsub.s32 %v589, %v591
  %v593 = vrot.slane %v579, %v592
  %596 = vst.msk [vmem:[#allocation2 + $0x1] sm:$0x1] %vm410, %v586
  %597 = vst.msk [vmem:[#allocation2 + $0x9] sm:$0x1] %vm410, %v593
  %v599 = vrot.slane %v490, 2
  %v600 = vsel %vm233, %v599, 0
  %602 = vmatprep.subr.mxu0 0.0
  %603 = vmatpush1.msra.mxu0 %v223
  %604 = vmatprep.subr.mxu0 0.0
  %605 = vmatpush1.msra.mxu0 0.0
  %606 = vmatprep.subr.mxu0 0.0
  %607 = vmatpush1.msra.mxu0 0.0
  %608 = vmatprep.subr.mxu0 0.0
  %609 = vmatpush1.msra.mxu0 0.0
  %610 = vmatprep.subr.mxu0 0.0
  %611 = vmatpush1.msra.mxu0 0.0
  %612 = vmatprep.subr.mxu0 0.0
  %613 = vmatpush1.msra.mxu0 0.0
  %614 = vmatprep.subr.mxu0 0.0
  %615 = vmatpush1.msra.mxu0 0.0
  %616 = vmatprep.subr.mxu0 0.0
  %617 = vmatpush1.msra.mxu0 0.0
  %618 = vmatprep.subr.mxu0 0.0
  %619 = vmatpush1.msra.mxu0 0.0
  %620 = vmatprep.subr.mxu0 0.0
  %621 = vmatpush1.msra.mxu0 0.0
  %622 = vmatprep.subr.mxu0 0.0
  %623 = vmatpush1.msra.mxu0 0.0
  %624 = vmatprep.subr.mxu0 0.0
  %625 = vmatpush1.msra.mxu0 0.0
  %626 = vmatprep.subr.mxu0 0.0
  %627 = vmatpush1.msra.mxu0 0.0
  %628 = vmatprep.subr.mxu0 0.0
  %629 = vmatpush1.msra.mxu0 0.0
  %630 = vmatprep.subr.mxu0 0.0
  %631 = vmatpush1.msra.mxu0 0.0
  %632 = vmatprep.subr.mxu0 0.0
  %633 = vmatpush1.msra.mxu0 0.0
  %634 = vmatprep.subr.mxu0 0.0
  %635 = vmatpush1.msra.mxu0 0.0
  %636 = vmatprep.subr.mxu0 0.0
  %637 = vmatpush1.msra.mxu0 0.0
  %638 = vmatprep.subr.mxu0 0.0
  %639 = vmatpush1.msra.mxu0 0.0
  %640 = vmatprep.subr.mxu0 0.0
  %641 = vmatpush1.msra.mxu0 0.0
  %642 = vmatprep.subr.mxu0 0.0
  %643 = vmatpush1.msra.mxu0 0.0
  %644 = vmatprep.subr.mxu0 0.0
  %645 = vmatpush1.msra.mxu0 0.0
  %646 = vmatprep.subr.mxu0 0.0
  %647 = vmatpush1.msra.mxu0 0.0
  %648 = vmatprep.subr.mxu0 0.0
  %649 = vmatpush1.msra.mxu0 0.0
  %650 = vmatprep.subr.mxu0 0.0
  %651 = vmatpush1.msra.mxu0 0.0
  %652 = vmatprep.subr.mxu0 0.0
  %653 = vmatpush1.msra.mxu0 0.0
  %654 = vmatprep.subr.mxu0 0.0
  %655 = vmatpush1.msra.mxu0 0.0
  %656 = vmatprep.subr.mxu0 0.0
  %657 = vmatpush1.msra.mxu0 0.0
  %658 = vmatprep.subr.mxu0 0.0
  %659 = vmatpush1.msra.mxu0 0.0
  %660 = vmatprep.subr.mxu0 0.0
  %661 = vmatpush1.msra.mxu0 0.0
  %662 = vmatprep.subr.mxu0 0.0
  %663 = vmatpush1.msra.mxu0 0.0
  %664 = vmatprep.subr.mxu0 0.0
  %665 = vmatpush1.msra.mxu0 0.0
  %666 = vmatprep.mubr.f32.mxu0 0.0
  %667 = vmatmul.mubr.f32.gmra.mrb[0].mxu0 %v600
  %v668 = vpop.f32.mrb[0].mxu0
  %v669 = vadd.f32 0.0, %v668
  %v670 = vpop.f32.mrb[0].mxu0
  %671 = vdwg.mxu0
  %v673 = vrot.slane %v669, 4
  %v675 = vadd.f32 %v215, %v673
  %v676 = vtanh.pop %v675
  %v677 = vrot.slane %v570, 4
  %678 = vrot.lane.b32.xlu0 %v677, 8
  %v679 = vpop.permute.xlu0 %678
  %v681 = vsel %vm233, %v676, %v679
  %v683 = vrot.slane %v681, 4
  %v684 = vsel %vm310, %v683, 0
  %686 = vmatprep.subr.mxu0 0.0
  %687 = vmatpush1.msra.mxu0 %v224
  %688 = vmatprep.subr.mxu0 0.0
  %689 = vmatpush1.msra.mxu0 %v225
  %690 = vmatprep.subr.mxu0 0.0
  %691 = vmatpush1.msra.mxu0 0.0
  %692 = vmatprep.subr.mxu0 0.0
  %693 = vmatpush1.msra.mxu0 0.0
  %694 = vmatprep.subr.mxu0 0.0
  %695 = vmatpush1.msra.mxu0 0.0
  %696 = vmatprep.subr.mxu0 0.0
  %697 = vmatpush1.msra.mxu0 0.0
  %698 = vmatprep.subr.mxu0 0.0
  %699 = vmatpush1.msra.mxu0 0.0
  %700 = vmatprep.subr.mxu0 0.0
  %701 = vmatpush1.msra.mxu0 0.0
  %702 = vmatprep.subr.mxu0 0.0
  %703 = vmatpush1.msra.mxu0 0.0
  %704 = vmatprep.subr.mxu0 0.0
  %705 = vmatpush1.msra.mxu0 0.0
  %706 = vmatprep.subr.mxu0 0.0
  %707 = vmatpush1.msra.mxu0 0.0
  %708 = vmatprep.subr.mxu0 0.0
  %709 = vmatpush1.msra.mxu0 0.0
  %710 = vmatprep.subr.mxu0 0.0
  %711 = vmatpush1.msra.mxu0 0.0
  %712 = vmatprep.subr.mxu0 0.0
  %713 = vmatpush1.msra.mxu0 0.0
  %714 = vmatprep.subr.mxu0 0.0
  %715 = vmatpush1.msra.mxu0 0.0
  %716 = vmatprep.subr.mxu0 0.0
  %717 = vmatpush1.msra.mxu0 0.0
  %718 = vmatprep.subr.mxu0 0.0
  %719 = vmatpush1.msra.mxu0 0.0
  %720 = vmatprep.subr.mxu0 0.0
  %721 = vmatpush1.msra.mxu0 0.0
  %722 = vmatprep.subr.mxu0 0.0
  %723 = vmatpush1.msra.mxu0 0.0
  %724 = vmatprep.subr.mxu0 0.0
  %725 = vmatpush1.msra.mxu0 0.0
  %726 = vmatprep.subr.mxu0 0.0
  %727 = vmatpush1.msra.mxu0 0.0
  %728 = vmatprep.subr.mxu0 0.0
  %729 = vmatpush1.msra.mxu0 0.0
  %730 = vmatprep.subr.mxu0 0.0
  %731 = vmatpush1.msra.mxu0 0.0
  %732 = vmatprep.subr.mxu0 0.0
  %733 = vmatpush1.msra.mxu0 0.0
  %734 = vmatprep.subr.mxu0 0.0
  %735 = vmatpush1.msra.mxu0 0.0
  %736 = vmatprep.subr.mxu0 0.0
  %737 = vmatpush1.msra.mxu0 0.0
  %738 = vmatprep.subr.mxu0 0.0
  %739 = vmatpush1.msra.mxu0 0.0
  %740 = vmatprep.subr.mxu0 0.0
  %741 = vmatpush1.msra.mxu0 0.0
  %742 = vmatprep.subr.mxu0 0.0
  %743 = vmatpush1.msra.mxu0 0.0
  %744 = vmatprep.subr.mxu0 0.0
  %745 = vmatpush1.msra.mxu0 0.0
  %746 = vmatprep.subr.mxu0 0.0
  %747 = vmatpush1.msra.mxu0 0.0
  %748 = vmatprep.subr.mxu0 0.0
  %749 = vmatpush1.msra.mxu0 0.0
  %750 = vmatprep.mubr.f32.mxu0 0.0
  %751 = vmatmul.mubr.f32.gmra.mrb[0].mxu0 %v684
  %v752 = vpop.f32.mrb[0].mxu0
  %v753 = vadd.f32 %v231, %v752
  %v754 = vpop.f32.mrb[0].mxu0
  %755 = vdwg.mxu0
  %v756 = vtanh.pop %v753
  %v759 = vunpack.c.l.s4 1966171168
  %v760 = vunpack.c.0.s8 %v759
  %v761 = vlaneseq
  %v762 = vshrl.u32 %v761, 7
  %v763 = vsub.s32 %v760, %v762
  %v764 = vrot.slane %v756, %v763
  %v765 = vcombine.high %v764, %v764
  %v767 = vunpack.c.l.s4 1966171168
  %v768 = vunpack.c.0.s8 %v767
  %v769 = vlaneseq
  %v770 = vshrl.u32 %v769, 7
  %v771 = vsub.s32 %v768, %v770
  %v772 = vrot.slane %v764, %v771
  %v774 = vunpack.c.l.s4 1966171168
  %v775 = vunpack.c.0.s8 %v774
  %v776 = vlaneseq
  %v777 = vshrl.u32 %v776, 7
  %v778 = vsub.s32 %v775, %v777
  %v779 = vrot.slane %v765, %v778
  %782 = vst.msk [vmem:[#allocation2 + $0x2] sm:$0x1] %vm410, %v772
  %783 = vst.msk [vmem:[#allocation2 + $0xa] sm:$0x1] %vm410, %v779
  %v785 = vrot.slane %v676, 4
  %v786 = vsel %vm233, %v785, 0
  %788 = vmatprep.subr.mxu0 0.0
  %789 = vmatpush1.msra.mxu0 %v223
  %790 = vmatprep.subr.mxu0 0.0
  %791 = vmatpush1.msra.mxu0 0.0
  %792 = vmatprep.subr.mxu0 0.0
  %793 = vmatpush1.msra.mxu0 0.0
  %794 = vmatprep.subr.mxu0 0.0
  %795 = vmatpush1.msra.mxu0 0.0
  %796 = vmatprep.subr.mxu0 0.0
  %797 = vmatpush1.msra.mxu0 0.0
  %798 = vmatprep.subr.mxu0 0.0
  %799 = vmatpush1.msra.mxu0 0.0
  %800 = vmatprep.subr.mxu0 0.0
  %801 = vmatpush1.msra.mxu0 0.0
  %802 = vmatprep.subr.mxu0 0.0
  %803 = vmatpush1.msra.mxu0 0.0
  %804 = vmatprep.subr.mxu0 0.0
  %805 = vmatpush1.msra.mxu0 0.0
  %806 = vmatprep.subr.mxu0 0.0
  %807 = vmatpush1.msra.mxu0 0.0
  %808 = vmatprep.subr.mxu0 0.0
  %809 = vmatpush1.msra.mxu0 0.0
  %810 = vmatprep.subr.mxu0 0.0
  %811 = vmatpush1.msra.mxu0 0.0
  %812 = vmatprep.subr.mxu0 0.0
  %813 = vmatpush1.msra.mxu0 0.0
  %814 = vmatprep.subr.mxu0 0.0
  %815 = vmatpush1.msra.mxu0 0.0
  %816 = vmatprep.subr.mxu0 0.0
  %817 = vmatpush1.msra.mxu0 0.0
  %818 = vmatprep.subr.mxu0 0.0
  %819 = vmatpush1.msra.mxu0 0.0
  %820 = vmatprep.subr.mxu0 0.0
  %821 = vmatpush1.msra.mxu0 0.0
  %822 = vmatprep.subr.mxu0 0.0
  %823 = vmatpush1.msra.mxu0 0.0
  %824 = vmatprep.subr.mxu0 0.0
  %825 = vmatpush1.msra.mxu0 0.0
  %826 = vmatprep.subr.mxu0 0.0
  %827 = vmatpush1.msra.mxu0 0.0
  %828 = vmatprep.subr.mxu0 0.0
  %829 = vmatpush1.msra.mxu0 0.0
  %830 = vmatprep.subr.mxu0 0.0
  %831 = vmatpush1.msra.mxu0 0.0
  %832 = vmatprep.subr.mxu0 0.0
  %833 = vmatpush1.msra.mxu0 0.0
  %834 = vmatprep.subr.mxu0 0.0
  %835 = vmatpush1.msra.mxu0 0.0
  %836 = vmatprep.subr.mxu0 0.0
  %837 = vmatpush1.msra.mxu0 0.0
  %838 = vmatprep.subr.mxu0 0.0
  %839 = vmatpush1.msra.mxu0 0.0
  %840 = vmatprep.subr.mxu0 0.0
  %841 = vmatpush1.msra.mxu0 0.0
  %842 = vmatprep.subr.mxu0 0.0
  %843 = vmatpush1.msra.mxu0 0.0
  %844 = vmatprep.subr.mxu0 0.0
  %845 = vmatpush1.msra.mxu0 0.0
  %846 = vmatprep.subr.mxu0 0.0
  %847 = vmatpush1.msra.mxu0 0.0
  %848 = vmatprep.subr.mxu0 0.0
  %849 = vmatpush1.msra.mxu0 0.0
  %850 = vmatprep.subr.mxu0 0.0
  %851 = vmatpush1.msra.mxu0 0.0
  %852 = vmatprep.mubr.f32.mxu0 0.0
  %853 = vmatmul.mubr.f32.gmra.mrb[0].mxu0 %v786
  %v854 = vpop.f32.mrb[0].mxu0
  %v855 = vadd.f32 0.0, %v854
  %v856 = vpop.f32.mrb[0].mxu0
  %857 = vdwg.mxu0
  %v859 = vrot.slane %v855, 2
  %v861 = vadd.f32 %v215, %v859
  %v862 = vtanh.pop %v861
  %v863 = vrot.slane %v756, 2
  %864 = vrot.lane.b32.xlu0 %v863, 8
  %v865 = vpop.permute.xlu0 %864
  %v867 = vsel %vm233, %v862, %v865
  %v869 = vrot.slane %v867, 6
  %v870 = vsel %vm310, %v869, 0
  %872 = vmatprep.subr.mxu0 0.0
  %873 = vmatpush1.msra.mxu0 %v224
  %874 = vmatprep.subr.mxu0 0.0
  %875 = vmatpush1.msra.mxu0 %v225
  %876 = vmatprep.subr.mxu0 0.0
  %877 = vmatpush1.msra.mxu0 0.0
  %878 = vmatprep.subr.mxu0 0.0
  %879 = vmatpush1.msra.mxu0 0.0
  %880 = vmatprep.subr.mxu0 0.0
  %881 = vmatpush1.msra.mxu0 0.0
  %882 = vmatprep.subr.mxu0 0.0
  %883 = vmatpush1.msra.mxu0 0.0
  %884 = vmatprep.subr.mxu0 0.0
  %885 = vmatpush1.msra.mxu0 0.0
  %886 = vmatprep.subr.mxu0 0.0
  %887 = vmatpush1.msra.mxu0 0.0
  %888 = vmatprep.subr.mxu0 0.0
  %889 = vmatpush1.msra.mxu0 0.0
  %890 = vmatprep.subr.mxu0 0.0
  %891 = vmatpush1.msra.mxu0 0.0
  %892 = vmatprep.subr.mxu0 0.0
  %893 = vmatpush1.msra.mxu0 0.0
  %894 = vmatprep.subr.mxu0 0.0
  %895 = vmatpush1.msra.mxu0 0.0
  %896 = vmatprep.subr.mxu0 0.0
  %897 = vmatpush1.msra.mxu0 0.0
  %898 = vmatprep.subr.mxu0 0.0
  %899 = vmatpush1.msra.mxu0 0.0
  %900 = vmatprep.subr.mxu0 0.0
  %901 = vmatpush1.msra.mxu0 0.0
  %902 = vmatprep.subr.mxu0 0.0
  %903 = vmatpush1.msra.mxu0 0.0
  %904 = vmatprep.subr.mxu0 0.0
  %905 = vmatpush1.msra.mxu0 0.0
  %906 = vmatprep.subr.mxu0 0.0
  %907 = vmatpush1.msra.mxu0 0.0
  %908 = vmatprep.subr.mxu0 0.0
  %909 = vmatpush1.msra.mxu0 0.0
  %910 = vmatprep.subr.mxu0 0.0
  %911 = vmatpush1.msra.mxu0 0.0
  %912 = vmatprep.subr.mxu0 0.0
  %913 = vmatpush1.msra.mxu0 0.0
  %914 = vmatprep.subr.mxu0 0.0
  %915 = vmatpush1.msra.mxu0 0.0
  %916 = vmatprep.subr.mxu0 0.0
  %917 = vmatpush1.msra.mxu0 0.0
  %918 = vmatprep.subr.mxu0 0.0
  %919 = vmatpush1.msra.mxu0 0.0
  %920 = vmatprep.subr.mxu0 0.0
  %921 = vmatpush1.msra.mxu0 0.0
  %922 = vmatprep.subr.mxu0 0.0
  %923 = vmatpush1.msra.mxu0 0.0
  %924 = vmatprep.subr.mxu0 0.0
  %925 = vmatpush1.msra.mxu0 0.0
  %926 = vmatprep.subr.mxu0 0.0
  %927 = vmatpush1.msra.mxu0 0.0
  %928 = vmatprep.subr.mxu0 0.0
  %929 = vmatpush1.msra.mxu0 0.0
  %930 = vmatprep.subr.mxu0 0.0
  %931 = vmatpush1.msra.mxu0 0.0
  %932 = vmatprep.subr.mxu0 0.0
  %933 = vmatpush1.msra.mxu0 0.0
  %934 = vmatprep.subr.mxu0 0.0
  %935 = vmatpush1.msra.mxu0 0.0
  %936 = vmatprep.mubr.f32.mxu0 0.0
  %937 = vmatmul.mubr.f32.gmra.mrb[0].mxu0 %v870
  %v938 = vpop.f32.mrb[0].mxu0
  %v939 = vadd.f32 %v231, %v938
  %v940 = vpop.f32.mrb[0].mxu0
  %941 = vdwg.mxu0
  %v942 = vtanh.pop %v939
  %v945 = vunpack.c.l.s4 1966171168
  %v946 = vunpack.c.0.s8 %v945
  %v947 = vlaneseq
  %v948 = vshrl.u32 %v947, 7
  %v949 = vsub.s32 %v946, %v948
  %v950 = vrot.slane %v942, %v949
  %v951 = vcombine.high %v950, %v950
  %v953 = vunpack.c.l.s4 1966171168
  %v954 = vunpack.c.0.s8 %v953
  %v955 = vlaneseq
  %v956 = vshrl.u32 %v955, 7
  %v957 = vsub.s32 %v954, %v956
  %v958 = vrot.slane %v950, %v957
  %v960 = vunpack.c.l.s4 1966171168
  %v961 = vunpack.c.0.s8 %v960
  %v962 = vlaneseq
  %v963 = vshrl.u32 %v962, 7
  %v964 = vsub.s32 %v961, %v963
  %v965 = vrot.slane %v951, %v964
  %968 = vst.msk [vmem:[#allocation2 + $0x3] sm:$0x1] %vm410, %v958
  %969 = vst.msk [vmem:[#allocation2 + $0xb] sm:$0x1] %vm410, %v965
  %v971 = vrot.slane %v862, 6
  %v972 = vsel %vm233, %v971, 0
  %974 = vmatprep.subr.mxu0 0.0
  %975 = vmatpush1.msra.mxu0 %v223
  %976 = vmatprep.subr.mxu0 0.0
  %977 = vmatpush1.msra.mxu0 0.0
  %978 = vmatprep.subr.mxu0 0.0
  %979 = vmatpush1.msra.mxu0 0.0
  %980 = vmatprep.subr.mxu0 0.0
  %981 = vmatpush1.msra.mxu0 0.0
  %982 = vmatprep.subr.mxu0 0.0
  %983 = vmatpush1.msra.mxu0 0.0
  %984 = vmatprep.subr.mxu0 0.0
  %985 = vmatpush1.msra.mxu0 0.0
  %986 = vmatprep.subr.mxu0 0.0
  %987 = vmatpush1.msra.mxu0 0.0
  %988 = vmatprep.subr.mxu0 0.0
  %989 = vmatpush1.msra.mxu0 0.0
  %990 = vmatprep.subr.mxu0 0.0
  %991 = vmatpush1.msra.mxu0 0.0
  %992 = vmatprep.subr.mxu0 0.0
  %993 = vmatpush1.msra.mxu0 0.0
  %994 = vmatprep.subr.mxu0 0.0
  %995 = vmatpush1.msra.mxu0 0.0
  %996 = vmatprep.subr.mxu0 0.0
  %997 = vmatpush1.msra.mxu0 0.0
  %998 = vmatprep.subr.mxu0 0.0
  %999 = vmatpush1.msra.mxu0 0.0
  %1000 = vmatprep.subr.mxu0 0.0
  %1001 = vmatpush1.msra.mxu0 0.0
  %1002 = vmatprep.subr.mxu0 0.0
  %1003 = vmatpush1.msra.mxu0 0.0
  %1004 = vmatprep.subr.mxu0 0.0
  %1005 = vmatpush1.msra.mxu0 0.0
  %1006 = vmatprep.subr.mxu0 0.0
  %1007 = vmatpush1.msra.mxu0 0.0
  %1008 = vmatprep.subr.mxu0 0.0
  %1009 = vmatpush1.msra.mxu0 0.0
  %1010 = vmatprep.subr.mxu0 0.0
  %1011 = vmatpush1.msra.mxu0 0.0
  %1012 = vmatprep.subr.mxu0 0.0
  %1013 = vmatpush1.msra.mxu0 0.0
  %1014 = vmatprep.subr.mxu0 0.0
  %1015 = vmatpush1.msra.mxu0 0.0
  %1016 = vmatprep.subr.mxu0 0.0
  %1017 = vmatpush1.msra.mxu0 0.0
  %1018 = vmatprep.subr.mxu0 0.0
  %1019 = vmatpush1.msra.mxu0 0.0
  %1020 = vmatprep.subr.mxu0 0.0
  %1021 = vmatpush1.msra.mxu0 0.0
  %1022 = vmatprep.subr.mxu0 0.0
  %1023 = vmatpush1.msra.mxu0 0.0
  %1024 = vmatprep.subr.mxu0 0.0
  %1025 = vmatpush1.msra.mxu0 0.0
  %1026 = vmatprep.subr.mxu0 0.0
  %1027 = vmatpush1.msra.mxu0 0.0
  %1028 = vmatprep.subr.mxu0 0.0
  %1029 = vmatpush1.msra.mxu0 0.0
  %1030 = vmatprep.subr.mxu0 0.0
  %1031 = vmatpush1.msra.mxu0 0.0
  %1032 = vmatprep.subr.mxu0 0.0
  %1033 = vmatpush1.msra.mxu0 0.0
  %1034 = vmatprep.subr.mxu0 0.0
  %1035 = vmatpush1.msra.mxu0 0.0
  %1036 = vmatprep.subr.mxu0 0.0
  %1037 = vmatpush1.msra.mxu0 0.0
  %1038 = vmatprep.mubr.f32.mxu0 0.0
  %1039 = vmatmul.mubr.f32.gmra.mrb[0].mxu0 %v972
  %v1040 = vpop.f32.mrb[0].mxu0
  %v1041 = vadd.f32 0.0, %v1040
  %v1042 = vpop.f32.mrb[0].mxu0
  %1043 = vdwg.mxu0
  %v1044 = vadd.f32 %v220, %v1041
  %v1045 = vtanh.pop %v1044
  %1046 = vrot.lane.b32.xlu0 %v942, 8
  %v1047 = vpop.permute.xlu0 %1046
  %v1049 = vsel %vm233, %v1045, %v1047
  %v1051 = vsel %vm310, %v1049, 0
  %1053 = vmatprep.subr.mxu0 0.0
  %1054 = vmatpush1.msra.mxu0 %v224
  %1055 = vmatprep.subr.mxu0 0.0
  %1056 = vmatpush1.msra.mxu0 %v225
  %1057 = vmatprep.subr.mxu0 0.0
  %1058 = vmatpush1.msra.mxu0 0.0
  %1059 = vmatprep.subr.mxu0 0.0
  %1060 = vmatpush1.msra.mxu0 0.0
  %1061 = vmatprep.subr.mxu0 0.0
  %1062 = vmatpush1.msra.mxu0 0.0
  %1063 = vmatprep.subr.mxu0 0.0
  %1064 = vmatpush1.msra.mxu0 0.0
  %1065 = vmatprep.subr.mxu0 0.0
  %1066 = vmatpush1.msra.mxu0 0.0
  %1067 = vmatprep.subr.mxu0 0.0
  %1068 = vmatpush1.msra.mxu0 0.0
  %1069 = vmatprep.subr.mxu0 0.0
  %1070 = vmatpush1.msra.mxu0 0.0
  %1071 = vmatprep.subr.mxu0 0.0
  %1072 = vmatpush1.msra.mxu0 0.0
  %1073 = vmatprep.subr.mxu0 0.0
  %1074 = vmatpush1.msra.mxu0 0.0
  %1075 = vmatprep.subr.mxu0 0.0
  %1076 = vmatpush1.msra.mxu0 0.0
  %1077 = vmatprep.subr.mxu0 0.0
  %1078 = vmatpush1.msra.mxu0 0.0
  %1079 = vmatprep.subr.mxu0 0.0
  %1080 = vmatpush1.msra.mxu0 0.0
  %1081 = vmatprep.subr.mxu0 0.0
  %1082 = vmatpush1.msra.mxu0 0.0
  %1083 = vmatprep.subr.mxu0 0.0
  %1084 = vmatpush1.msra.mxu0 0.0
  %1085 = vmatprep.subr.mxu0 0.0
  %1086 = vmatpush1.msra.mxu0 0.0
  %1087 = vmatprep.subr.mxu0 0.0
  %1088 = vmatpush1.msra.mxu0 0.0
  %1089 = vmatprep.subr.mxu0 0.0
  %1090 = vmatpush1.msra.mxu0 0.0
  %1091 = vmatprep.subr.mxu0 0.0
  %1092 = vmatpush1.msra.mxu0 0.0
  %1093 = vmatprep.subr.mxu0 0.0
  %1094 = vmatpush1.msra.mxu0 0.0
  %1095 = vmatprep.subr.mxu0 0.0
  %1096 = vmatpush1.msra.mxu0 0.0
  %1097 = vmatprep.subr.mxu0 0.0
  %1098 = vmatpush1.msra.mxu0 0.0
  %1099 = vmatprep.subr.mxu0 0.0
  %1100 = vmatpush1.msra.mxu0 0.0
  %1101 = vmatprep.subr.mxu0 0.0
  %1102 = vmatpush1.msra.mxu0 0.0
  %1103 = vmatprep.subr.mxu0 0.0
  %1104 = vmatpush1.msra.mxu0 0.0
  %1105 = vmatprep.subr.mxu0 0.0
  %1106 = vmatpush1.msra.mxu0 0.0
  %1107 = vmatprep.subr.mxu0 0.0
  %1108 = vmatpush1.msra.mxu0 0.0
  %1109 = vmatprep.subr.mxu0 0.0
  %1110 = vmatpush1.msra.mxu0 0.0
  %1111 = vmatprep.subr.mxu0 0.0
  %1112 = vmatpush1.msra.mxu0 0.0
  %1113 = vmatprep.subr.mxu0 0.0
  %1114 = vmatpush1.msra.mxu0 0.0
  %1115 = vmatprep.subr.mxu0 0.0
  %1116 = vmatpush1.msra.mxu0 0.0
  %1117 = vmatprep.mubr.f32.mxu0 0.0
  %1118 = vmatmul.mubr.f32.gmra.mrb[0].mxu0 %v1051
  %v1119 = vpop.f32.mrb[0].mxu0
  %v1120 = vadd.f32 %v231, %v1119
  %v1121 = vpop.f32.mrb[0].mxu0
  %1122 = vdwg.mxu0
  %v1123 = vtanh.pop %v1120
  %v1126 = vunpack.c.l.s4 1966171168
  %v1127 = vunpack.c.0.s8 %v1126
  %v1128 = vlaneseq
  %v1129 = vshrl.u32 %v1128, 7
  %v1130 = vsub.s32 %v1127, %v1129
  %v1131 = vrot.slane %v1123, %v1130
  %v1132 = vcombine.high %v1131, %v1131
  %v1134 = vunpack.c.l.s4 1966171168
  %v1135 = vunpack.c.0.s8 %v1134
  %v1136 = vlaneseq
  %v1137 = vshrl.u32 %v1136, 7
  %v1138 = vsub.s32 %v1135, %v1137
  %v1139 = vrot.slane %v1131, %v1138
  %v1141 = vunpack.c.l.s4 1966171168
  %v1142 = vunpack.c.0.s8 %v1141
  %v1143 = vlaneseq
  %v1144 = vshrl.u32 %v1143, 7
  %v1145 = vsub.s32 %v1142, %v1144
  %v1146 = vrot.slane %v1132, %v1145
  %1149 = vst.msk [vmem:[#allocation2 + $0x4] sm:$0x1] %vm410, %v1139
  %1150 = vst.msk [vmem:[#allocation2 + $0xc] sm:$0x1] %vm410, %v1146
  %v1152 = vsel %vm233, %v1045, 0
  %1154 = vmatprep.subr.mxu0 0.0
  %1155 = vmatpush1.msra.mxu0 %v223
  %1156 = vmatprep.subr.mxu0 0.0
  %1157 = vmatpush1.msra.mxu0 0.0
  %1158 = vmatprep.subr.mxu0 0.0
  %1159 = vmatpush1.msra.mxu0 0.0
  %1160 = vmatprep.subr.mxu0 0.0
  %1161 = vmatpush1.msra.mxu0 0.0
  %1162 = vmatprep.subr.mxu0 0.0
  %1163 = vmatpush1.msra.mxu0 0.0
  %1164 = vmatprep.subr.mxu0 0.0
  %1165 = vmatpush1.msra.mxu0 0.0
  %1166 = vmatprep.subr.mxu0 0.0
  %1167 = vmatpush1.msra.mxu0 0.0
  %1168 = vmatprep.subr.mxu0 0.0
  %1169 = vmatpush1.msra.mxu0 0.0
  %1170 = vmatprep.subr.mxu0 0.0
  %1171 = vmatpush1.msra.mxu0 0.0
  %1172 = vmatprep.subr.mxu0 0.0
  %1173 = vmatpush1.msra.mxu0 0.0
  %1174 = vmatprep.subr.mxu0 0.0
  %1175 = vmatpush1.msra.mxu0 0.0
  %1176 = vmatprep.subr.mxu0 0.0
  %1177 = vmatpush1.msra.mxu0 0.0
  %1178 = vmatprep.subr.mxu0 0.0
  %1179 = vmatpush1.msra.mxu0 0.0
  %1180 = vmatprep.subr.mxu0 0.0
  %1181 = vmatpush1.msra.mxu0 0.0
  %1182 = vmatprep.subr.mxu0 0.0
  %1183 = vmatpush1.msra.mxu0 0.0
  %1184 = vmatprep.subr.mxu0 0.0
  %1185 = vmatpush1.msra.mxu0 0.0
  %1186 = vmatprep.subr.mxu0 0.0
  %1187 = vmatpush1.msra.mxu0 0.0
  %1188 = vmatprep.subr.mxu0 0.0
  %1189 = vmatpush1.msra.mxu0 0.0
  %1190 = vmatprep.subr.mxu0 0.0
  %1191 = vmatpush1.msra.mxu0 0.0
  %1192 = vmatprep.subr.mxu0 0.0
  %1193 = vmatpush1.msra.mxu0 0.0
  %1194 = vmatprep.subr.mxu0 0.0
  %1195 = vmatpush1.msra.mxu0 0.0
  %1196 = vmatprep.subr.mxu0 0.0
  %1197 = vmatpush1.msra.mxu0 0.0
  %1198 = vmatprep.subr.mxu0 0.0
  %1199 = vmatpush1.msra.mxu0 0.0
  %1200 = vmatprep.subr.mxu0 0.0
  %1201 = vmatpush1.msra.mxu0 0.0
  %1202 = vmatprep.subr.mxu0 0.0
  %1203 = vmatpush1.msra.mxu0 0.0
  %1204 = vmatprep.subr.mxu0 0.0
  %1205 = vmatpush1.msra.mxu0 0.0
  %1206 = vmatprep.subr.mxu0 0.0
  %1207 = vmatpush1.msra.mxu0 0.0
  %1208 = vmatprep.subr.mxu0 0.0
  %1209 = vmatpush1.msra.mxu0 0.0
  %1210 = vmatprep.subr.mxu0 0.0
  %1211 = vmatpush1.msra.mxu0 0.0
  %1212 = vmatprep.subr.mxu0 0.0
  %1213 = vmatpush1.msra.mxu0 0.0
  %1214 = vmatprep.subr.mxu0 0.0
  %1215 = vmatpush1.msra.mxu0 0.0
  %1216 = vmatprep.subr.mxu0 0.0
  %1217 = vmatpush1.msra.mxu0 0.0
  %1218 = vmatprep.mubr.f32.mxu0 0.0
  %1219 = vmatmul.mubr.f32.gmra.mrb[0].mxu0 %v1152
  %v1220 = vpop.f32.mrb[0].mxu0
  %v1221 = vadd.f32 0.0, %v1220
  %v1222 = vpop.f32.mrb[0].mxu0
  %1223 = vdwg.mxu0
  %v1225 = vrot.slane %v1221, 6
  %v1227 = vadd.f32 %v220, %v1225
  %v1228 = vtanh.pop %v1227
  %v1229 = vrot.slane %v1123, 6
  %1230 = vrot.lane.b32.xlu0 %v1229, 8
  %v1231 = vpop.permute.xlu0 %1230
  %v1233 = vsel %vm233, %v1228, %v1231
  %v1235 = vrot.slane %v1233, 2
  %v1236 = vsel %vm310, %v1235, 0
  %1238 = vmatprep.subr.mxu0 0.0
  %1239 = vmatpush1.msra.mxu0 %v224
  %1240 = vmatprep.subr.mxu0 0.0
  %1241 = vmatpush1.msra.mxu0 %v225
  %1242 = vmatprep.subr.mxu0 0.0
  %1243 = vmatpush1.msra.mxu0 0.0
  %1244 = vmatprep.subr.mxu0 0.0
  %1245 = vmatpush1.msra.mxu0 0.0
  %1246 = vmatprep.subr.mxu0 0.0
  %1247 = vmatpush1.msra.mxu0 0.0
  %1248 = vmatprep.subr.mxu0 0.0
  %1249 = vmatpush1.msra.mxu0 0.0
  %1250 = vmatprep.subr.mxu0 0.0
  %1251 = vmatpush1.msra.mxu0 0.0
  %1252 = vmatprep.subr.mxu0 0.0
  %1253 = vmatpush1.msra.mxu0 0.0
  %1254 = vmatprep.subr.mxu0 0.0
  %1255 = vmatpush1.msra.mxu0 0.0
  %1256 = vmatprep.subr.mxu0 0.0
  %1257 = vmatpush1.msra.mxu0 0.0
  %1258 = vmatprep.subr.mxu0 0.0
  %1259 = vmatpush1.msra.mxu0 0.0
  %1260 = vmatprep.subr.mxu0 0.0
  %1261 = vmatpush1.msra.mxu0 0.0
  %1262 = vmatprep.subr.mxu0 0.0
  %1263 = vmatpush1.msra.mxu0 0.0
  %1264 = vmatprep.subr.mxu0 0.0
  %1265 = vmatpush1.msra.mxu0 0.0
  %1266 = vmatprep.subr.mxu0 0.0
  %1267 = vmatpush1.msra.mxu0 0.0
  %1268 = vmatprep.subr.mxu0 0.0
  %1269 = vmatpush1.msra.mxu0 0.0
  %1270 = vmatprep.subr.mxu0 0.0
  %1271 = vmatpush1.msra.mxu0 0.0
  %1272 = vmatprep.subr.mxu0 0.0
  %1273 = vmatpush1.msra.mxu0 0.0
  %1274 = vmatprep.subr.mxu0 0.0
  %1275 = vmatpush1.msra.mxu0 0.0
  %1276 = vmatprep.subr.mxu0 0.0
  %1277 = vmatpush1.msra.mxu0 0.0
  %1278 = vmatprep.subr.mxu0 0.0
  %1279 = vmatpush1.msra.mxu0 0.0
  %1280 = vmatprep.subr.mxu0 0.0
  %1281 = vmatpush1.msra.mxu0 0.0
  %1282 = vmatprep.subr.mxu0 0.0
  %1283 = vmatpush1.msra.mxu0 0.0
  %1284 = vmatprep.subr.mxu0 0.0
  %1285 = vmatpush1.msra.mxu0 0.0
  %1286 = vmatprep.subr.mxu0 0.0
  %1287 = vmatpush1.msra.mxu0 0.0
  %1288 = vmatprep.subr.mxu0 0.0
  %1289 = vmatpush1.msra.mxu0 0.0
  %1290 = vmatprep.subr.mxu0 0.0
  %1291 = vmatpush1.msra.mxu0 0.0
  %1292 = vmatprep.subr.mxu0 0.0
  %1293 = vmatpush1.msra.mxu0 0.0
  %1294 = vmatprep.subr.mxu0 0.0
  %1295 = vmatpush1.msra.mxu0 0.0
  %1296 = vmatprep.subr.mxu0 0.0
  %1297 = vmatpush1.msra.mxu0 0.0
  %1298 = vmatprep.subr.mxu0 0.0
  %1299 = vmatpush1.msra.mxu0 0.0
  %1300 = vmatprep.subr.mxu0 0.0
  %1301 = vmatpush1.msra.mxu0 0.0
  %1302 = vmatprep.mubr.f32.mxu0 0.0
  %1303 = vmatmul.mubr.f32.gmra.mrb[0].mxu0 %v1236
  %v1304 = vpop.f32.mrb[0].mxu0
  %v1305 = vadd.f32 %v231, %v1304
  %v1306 = vpop.f32.mrb[0].mxu0
  %1307 = vdwg.mxu0
  %v1308 = vtanh.pop %v1305
  %v1311 = vunpack.c.l.s4 1966171168
  %v1312 = vunpack.c.0.s8 %v1311
  %v1313 = vlaneseq
  %v1314 = vshrl.u32 %v1313, 7
  %v1315 = vsub.s32 %v1312, %v1314
  %v1316 = vrot.slane %v1308, %v1315
  %v1317 = vcombine.high %v1316, %v1316
  %v1319 = vunpack.c.l.s4 1966171168
  %v1320 = vunpack.c.0.s8 %v1319
  %v1321 = vlaneseq
  %v1322 = vshrl.u32 %v1321, 7
  %v1323 = vsub.s32 %v1320, %v1322
  %v1324 = vrot.slane %v1316, %v1323
  %v1326 = vunpack.c.l.s4 1966171168
  %v1327 = vunpack.c.0.s8 %v1326
  %v1328 = vlaneseq
  %v1329 = vshrl.u32 %v1328, 7
  %v1330 = vsub.s32 %v1327, %v1329
  %v1331 = vrot.slane %v1317, %v1330
  %1334 = vst.msk [vmem:[#allocation2 + $0x5] sm:$0x1] %vm410, %v1324
  %1335 = vst.msk [vmem:[#allocation2 + $0xd] sm:$0x1] %vm410, %v1331
  %v1337 = vrot.slane %v1228, 2
  %v1338 = vsel %vm233, %v1337, 0
  %1340 = vmatprep.subr.mxu0 0.0
  %1341 = vmatpush1.msra.mxu0 %v223
  %1342 = vmatprep.subr.mxu0 0.0
  %1343 = vmatpush1.msra.mxu0 0.0
  %1344 = vmatprep.subr.mxu0 0.0
  %1345 = vmatpush1.msra.mxu0 0.0
  %1346 = vmatprep.subr.mxu0 0.0
  %1347 = vmatpush1.msra.mxu0 0.0
  %1348 = vmatprep.subr.mxu0 0.0
  %1349 = vmatpush1.msra.mxu0 0.0
  %1350 = vmatprep.subr.mxu0 0.0
  %1351 = vmatpush1.msra.mxu0 0.0
  %1352 = vmatprep.subr.mxu0 0.0
  %1353 = vmatpush1.msra.mxu0 0.0
  %1354 = vmatprep.subr.mxu0 0.0
  %1355 = vmatpush1.msra.mxu0 0.0
  %1356 = vmatprep.subr.mxu0 0.0
  %1357 = vmatpush1.msra.mxu0 0.0
  %1358 = vmatprep.subr.mxu0 0.0
  %1359 = vmatpush1.msra.mxu0 0.0
  %1360 = vmatprep.subr.mxu0 0.0
  %1361 = vmatpush1.msra.mxu0 0.0
  %1362 = vmatprep.subr.mxu0 0.0
  %1363 = vmatpush1.msra.mxu0 0.0
  %1364 = vmatprep.subr.mxu0 0.0
  %1365 = vmatpush1.msra.mxu0 0.0
  %1366 = vmatprep.subr.mxu0 0.0
  %1367 = vmatpush1.msra.mxu0 0.0
  %1368 = vmatprep.subr.mxu0 0.0
  %1369 = vmatpush1.msra.mxu0 0.0
  %1370 = vmatprep.subr.mxu0 0.0
  %1371 = vmatpush1.msra.mxu0 0.0
  %1372 = vmatprep.subr.mxu0 0.0
  %1373 = vmatpush1.msra.mxu0 0.0
  %1374 = vmatprep.subr.mxu0 0.0
  %1375 = vmatpush1.msra.mxu0 0.0
  %1376 = vmatprep.subr.mxu0 0.0
  %1377 = vmatpush1.msra.mxu0 0.0
  %1378 = vmatprep.subr.mxu0 0.0
  %1379 = vmatpush1.msra.mxu0 0.0
  %1380 = vmatprep.subr.mxu0 0.0
  %1381 = vmatpush1.msra.mxu0 0.0
  %1382 = vmatprep.subr.mxu0 0.0
  %1383 = vmatpush1.msra.mxu0 0.0
  %1384 = vmatprep.subr.mxu0 0.0
  %1385 = vmatpush1.msra.mxu0 0.0
  %1386 = vmatprep.subr.mxu0 0.0
  %1387 = vmatpush1.msra.mxu0 0.0
  %1388 = vmatprep.subr.mxu0 0.0
  %1389 = vmatpush1.msra.mxu0 0.0
  %1390 = vmatprep.subr.mxu0 0.0
  %1391 = vmatpush1.msra.mxu0 0.0
  %1392 = vmatprep.subr.mxu0 0.0
  %1393 = vmatpush1.msra.mxu0 0.0
  %1394 = vmatprep.subr.mxu0 0.0
  %1395 = vmatpush1.msra.mxu0 0.0
  %1396 = vmatprep.subr.mxu0 0.0
  %1397 = vmatpush1.msra.mxu0 0.0
  %1398 = vmatprep.subr.mxu0 0.0
  %1399 = vmatpush1.msra.mxu0 0.0
  %1400 = vmatprep.subr.mxu0 0.0
  %1401 = vmatpush1.msra.mxu0 0.0
  %1402 = vmatprep.subr.mxu0 0.0
  %1403 = vmatpush1.msra.mxu0 0.0
  %1404 = vmatprep.mubr.f32.mxu0 0.0
  %1405 = vmatmul.mubr.f32.gmra.mrb[0].mxu0 %v1338
  %v1406 = vpop.f32.mrb[0].mxu0
  %v1407 = vadd.f32 0.0, %v1406
  %v1408 = vpop.f32.mrb[0].mxu0
  %1409 = vdwg.mxu0
  %v1411 = vrot.slane %v1407, 4
  %v1413 = vadd.f32 %v220, %v1411
  %v1414 = vtanh.pop %v1413
  %v1415 = vrot.slane %v1308, 4
  %1416 = vrot.lane.b32.xlu0 %v1415, 8
  %v1417 = vpop.permute.xlu0 %1416
  %v1419 = vsel %vm233, %v1414, %v1417
  %v1421 = vrot.slane %v1419, 4
  %v1422 = vsel %vm310, %v1421, 0
  %1424 = vmatprep.subr.mxu0 0.0
  %1425 = vmatpush1.msra.mxu0 %v224
  %1426 = vmatprep.subr.mxu0 0.0
  %1427 = vmatpush1.msra.mxu0 %v225
  %1428 = vmatprep.subr.mxu0 0.0
  %1429 = vmatpush1.msra.mxu0 0.0
  %1430 = vmatprep.subr.mxu0 0.0
  %1431 = vmatpush1.msra.mxu0 0.0
  %1432 = vmatprep.subr.mxu0 0.0
  %1433 = vmatpush1.msra.mxu0 0.0
  %1434 = vmatprep.subr.mxu0 0.0
  %1435 = vmatpush1.msra.mxu0 0.0
  %1436 = vmatprep.subr.mxu0 0.0
  %1437 = vmatpush1.msra.mxu0 0.0
  %1438 = vmatprep.subr.mxu0 0.0
  %1439 = vmatpush1.msra.mxu0 0.0
  %1440 = vmatprep.subr.mxu0 0.0
  %1441 = vmatpush1.msra.mxu0 0.0
  %1442 = vmatprep.subr.mxu0 0.0
  %1443 = vmatpush1.msra.mxu0 0.0
  %1444 = vmatprep.subr.mxu0 0.0
  %1445 = vmatpush1.msra.mxu0 0.0
  %1446 = vmatprep.subr.mxu0 0.0
  %1447 = vmatpush1.msra.mxu0 0.0
  %1448 = vmatprep.subr.mxu0 0.0
  %1449 = vmatpush1.msra.mxu0 0.0
  %1450 = vmatprep.subr.mxu0 0.0
  %1451 = vmatpush1.msra.mxu0 0.0
  %1452 = vmatprep.subr.mxu0 0.0
  %1453 = vmatpush1.msra.mxu0 0.0
  %1454 = vmatprep.subr.mxu0 0.0
  %1455 = vmatpush1.msra.mxu0 0.0
  %1456 = vmatprep.subr.mxu0 0.0
  %1457 = vmatpush1.msra.mxu0 0.0
  %1458 = vmatprep.subr.mxu0 0.0
  %1459 = vmatpush1.msra.mxu0 0.0
  %1460 = vmatprep.subr.mxu0 0.0
  %1461 = vmatpush1.msra.mxu0 0.0
  %1462 = vmatprep.subr.mxu0 0.0
  %1463 = vmatpush1.msra.mxu0 0.0
  %1464 = vmatprep.subr.mxu0 0.0
  %1465 = vmatpush1.msra.mxu0 0.0
  %1466 = vmatprep.subr.mxu0 0.0
  %1467 = vmatpush1.msra.mxu0 0.0
  %1468 = vmatprep.subr.mxu0 0.0
  %1469 = vmatpush1.msra.mxu0 0.0
  %1470 = vmatprep.subr.mxu0 0.0
  %1471 = vmatpush1.msra.mxu0 0.0
  %1472 = vmatprep.subr.mxu0 0.0
  %1473 = vmatpush1.msra.mxu0 0.0
  %1474 = vmatprep.subr.mxu0 0.0
  %1475 = vmatpush1.msra.mxu0 0.0
  %1476 = vmatprep.subr.mxu0 0.0
  %1477 = vmatpush1.msra.mxu0 0.0
  %1478 = vmatprep.subr.mxu0 0.0
  %1479 = vmatpush1.msra.mxu0 0.0
  %1480 = vmatprep.subr.mxu0 0.0
  %1481 = vmatpush1.msra.mxu0 0.0
  %1482 = vmatprep.subr.mxu0 0.0
  %1483 = vmatpush1.msra.mxu0 0.0
  %1484 = vmatprep.subr.mxu0 0.0
  %1485 = vmatpush1.msra.mxu0 0.0
  %1486 = vmatprep.subr.mxu0 0.0
  %1487 = vmatpush1.msra.mxu0 0.0
  %1488 = vmatprep.mubr.f32.mxu0 0.0
  %1489 = vmatmul.mubr.f32.gmra.mrb[0].mxu0 %v1422
  %v1490 = vpop.f32.mrb[0].mxu0
  %v1491 = vadd.f32 %v231, %v1490
  %v1492 = vpop.f32.mrb[0].mxu0
  %1493 = vdwg.mxu0
  %v1494 = vtanh.pop %v1491
  %v1497 = vunpack.c.l.s4 1966171168
  %v1498 = vunpack.c.0.s8 %v1497
  %v1499 = vlaneseq
  %v1500 = vshrl.u32 %v1499, 7
  %v1501 = vsub.s32 %v1498, %v1500
  %v1502 = vrot.slane %v1494, %v1501
  %v1503 = vcombine.high %v1502, %v1502
  %v1505 = vunpack.c.l.s4 1966171168
  %v1506 = vunpack.c.0.s8 %v1505
  %v1507 = vlaneseq
  %v1508 = vshrl.u32 %v1507, 7
  %v1509 = vsub.s32 %v1506, %v1508
  %v1510 = vrot.slane %v1502, %v1509
  %v1512 = vunpack.c.l.s4 1966171168
  %v1513 = vunpack.c.0.s8 %v1512
  %v1514 = vlaneseq
  %v1515 = vshrl.u32 %v1514, 7
  %v1516 = vsub.s32 %v1513, %v1515
  %v1517 = vrot.slane %v1503, %v1516
  %1520 = vst.msk [vmem:[#allocation2 + $0x6] sm:$0x1] %vm410, %v1510
  %1521 = vst.msk [vmem:[#allocation2 + $0xe] sm:$0x1] %vm410, %v1517
  %v1523 = vrot.slane %v1414, 4
  %v1524 = vsel %vm233, %v1523, 0
  %1526 = vmatprep.subr.mxu0 0.0
  %1527 = vmatpush1.msra.mxu0 %v223
  %1528 = vmatprep.subr.mxu0 0.0
  %1529 = vmatpush1.msra.mxu0 0.0
  %1530 = vmatprep.subr.mxu0 0.0
  %1531 = vmatpush1.msra.mxu0 0.0
  %1532 = vmatprep.subr.mxu0 0.0
  %1533 = vmatpush1.msra.mxu0 0.0
  %1534 = vmatprep.subr.mxu0 0.0
  %1535 = vmatpush1.msra.mxu0 0.0
  %1536 = vmatprep.subr.mxu0 0.0
  %1537 = vmatpush1.msra.mxu0 0.0
  %1538 = vmatprep.subr.mxu0 0.0
  %1539 = vmatpush1.msra.mxu0 0.0
  %1540 = vmatprep.subr.mxu0 0.0
  %1541 = vmatpush1.msra.mxu0 0.0
  %1542 = vmatprep.subr.mxu0 0.0
  %1543 = vmatpush1.msra.mxu0 0.0
  %1544 = vmatprep.subr.mxu0 0.0
  %1545 = vmatpush1.msra.mxu0 0.0
  %1546 = vmatprep.subr.mxu0 0.0
  %1547 = vmatpush1.msra.mxu0 0.0
  %1548 = vmatprep.subr.mxu0 0.0
  %1549 = vmatpush1.msra.mxu0 0.0
  %1550 = vmatprep.subr.mxu0 0.0
  %1551 = vmatpush1.msra.mxu0 0.0
  %1552 = vmatprep.subr.mxu0 0.0
  %1553 = vmatpush1.msra.mxu0 0.0
  %1554 = vmatprep.subr.mxu0 0.0
  %1555 = vmatpush1.msra.mxu0 0.0
  %1556 = vmatprep.subr.mxu0 0.0
  %1557 = vmatpush1.msra.mxu0 0.0
  %1558 = vmatprep.subr.mxu0 0.0
  %1559 = vmatpush1.msra.mxu0 0.0
  %1560 = vmatprep.subr.mxu0 0.0
  %1561 = vmatpush1.msra.mxu0 0.0
  %1562 = vmatprep.subr.mxu0 0.0
  %1563 = vmatpush1.msra.mxu0 0.0
  %1564 = vmatprep.subr.mxu0 0.0
  %1565 = vmatpush1.msra.mxu0 0.0
  %1566 = vmatprep.subr.mxu0 0.0
  %1567 = vmatpush1.msra.mxu0 0.0
  %1568 = vmatprep.subr.mxu0 0.0
  %1569 = vmatpush1.msra.mxu0 0.0
  %1570 = vmatprep.subr.mxu0 0.0
  %1571 = vmatpush1.msra.mxu0 0.0
  %1572 = vmatprep.subr.mxu0 0.0
  %1573 = vmatpush1.msra.mxu0 0.0
  %1574 = vmatprep.subr.mxu0 0.0
  %1575 = vmatpush1.msra.mxu0 0.0
  %1576 = vmatprep.subr.mxu0 0.0
  %1577 = vmatpush1.msra.mxu0 0.0
  %1578 = vmatprep.subr.mxu0 0.0
  %1579 = vmatpush1.msra.mxu0 0.0
  %1580 = vmatprep.subr.mxu0 0.0
  %1581 = vmatpush1.msra.mxu0 0.0
  %1582 = vmatprep.subr.mxu0 0.0
  %1583 = vmatpush1.msra.mxu0 0.0
  %1584 = vmatprep.subr.mxu0 0.0
  %1585 = vmatpush1.msra.mxu0 0.0
  %1586 = vmatprep.subr.mxu0 0.0
  %1587 = vmatpush1.msra.mxu0 0.0
  %1588 = vmatprep.subr.mxu0 0.0
  %1589 = vmatpush1.msra.mxu0 0.0
  %1590 = vmatprep.mubr.f32.mxu0 0.0
  %1591 = vmatmul.mubr.f32.gmra.mrb[0].mxu0 %v1524
  %v1592 = vpop.f32.mrb[0].mxu0
  %v1593 = vadd.f32 0.0, %v1592
  %v1594 = vpop.f32.mrb[0].mxu0
  %1595 = vdwg.mxu0
  %v1597 = vrot.slane %v1593, 2
  %v1599 = vadd.f32 %v220, %v1597
  %v1600 = vtanh.pop %v1599
  %v1601 = vrot.slane %v1494, 2
  %1602 = vrot.lane.b32.xlu0 %v1601, 8
  %v1603 = vpop.permute.xlu0 %1602
  %v1605 = vsel %vm233, %v1600, %v1603
  %v1607 = vrot.slane %v1605, 6
  %v1608 = vsel %vm310, %v1607, 0
  %1610 = vmatprep.subr.mxu0 0.0
  %1611 = vmatpush1.msra.mxu0 %v224
  %1612 = vmatprep.subr.mxu0 0.0
  %1613 = vmatpush1.msra.mxu0 %v225
  %1614 = vmatprep.subr.mxu0 0.0
  %1615 = vmatpush1.msra.mxu0 0.0
  %1616 = vmatprep.subr.mxu0 0.0
  %1617 = vmatpush1.msra.mxu0 0.0
  %1618 = vmatprep.subr.mxu0 0.0
  %1619 = vmatpush1.msra.mxu0 0.0
  %1620 = vmatprep.subr.mxu0 0.0
  %1621 = vmatpush1.msra.mxu0 0.0
  %1622 = vmatprep.subr.mxu0 0.0
  %1623 = vmatpush1.msra.mxu0 0.0
  %1624 = vmatprep.subr.mxu0 0.0
  %1625 = vmatpush1.msra.mxu0 0.0
  %1626 = vmatprep.subr.mxu0 0.0
  %1627 = vmatpush1.msra.mxu0 0.0
  %1628 = vmatprep.subr.mxu0 0.0
  %1629 = vmatpush1.msra.mxu0 0.0
  %1630 = vmatprep.subr.mxu0 0.0
  %1631 = vmatpush1.msra.mxu0 0.0
  %1632 = vmatprep.subr.mxu0 0.0
  %1633 = vmatpush1.msra.mxu0 0.0
  %1634 = vmatprep.subr.mxu0 0.0
  %1635 = vmatpush1.msra.mxu0 0.0
  %1636 = vmatprep.subr.mxu0 0.0
  %1637 = vmatpush1.msra.mxu0 0.0
  %1638 = vmatprep.subr.mxu0 0.0
  %1639 = vmatpush1.msra.mxu0 0.0
  %1640 = vmatprep.subr.mxu0 0.0
  %1641 = vmatpush1.msra.mxu0 0.0
  %1642 = vmatprep.subr.mxu0 0.0
  %1643 = vmatpush1.msra.mxu0 0.0
  %1644 = vmatprep.subr.mxu0 0.0
  %1645 = vmatpush1.msra.mxu0 0.0
  %1646 = vmatprep.subr.mxu0 0.0
  %1647 = vmatpush1.msra.mxu0 0.0
  %1648 = vmatprep.subr.mxu0 0.0
  %1649 = vmatpush1.msra.mxu0 0.0
  %1650 = vmatprep.subr.mxu0 0.0
  %1651 = vmatpush1.msra.mxu0 0.0
  %1652 = vmatprep.subr.mxu0 0.0
  %1653 = vmatpush1.msra.mxu0 0.0
  %1654 = vmatprep.subr.mxu0 0.0
  %1655 = vmatpush1.msra.mxu0 0.0
  %1656 = vmatprep.subr.mxu0 0.0
  %1657 = vmatpush1.msra.mxu0 0.0
  %1658 = vmatprep.subr.mxu0 0.0
  %1659 = vmatpush1.msra.mxu0 0.0
  %1660 = vmatprep.subr.mxu0 0.0
  %1661 = vmatpush1.msra.mxu0 0.0
  %1662 = vmatprep.subr.mxu0 0.0
  %1663 = vmatpush1.msra.mxu0 0.0
  %1664 = vmatprep.subr.mxu0 0.0
  %1665 = vmatpush1.msra.mxu0 0.0
  %1666 = vmatprep.subr.mxu0 0.0
  %1667 = vmatpush1.msra.mxu0 0.0
  %1668 = vmatprep.subr.mxu0 0.0
  %1669 = vmatpush1.msra.mxu0 0.0
  %1670 = vmatprep.subr.mxu0 0.0
  %1671 = vmatpush1.msra.mxu0 0.0
  %1672 = vmatprep.subr.mxu0 0.0
  %1673 = vmatpush1.msra.mxu0 0.0
  %1674 = vmatprep.mubr.f32.mxu0 0.0
  %1675 = vmatmul.mubr.f32.gmra.mrb[0].mxu0 %v1608
  %v1676 = vpop.f32.mrb[0].mxu0
  %v1677 = vadd.f32 %v231, %v1676
  %v1678 = vpop.f32.mrb[0].mxu0
  %1679 = vdwg.mxu0
  %v1680 = vtanh.pop %v1677
  %v1683 = vunpack.c.l.s4 1966171168
  %v1684 = vunpack.c.0.s8 %v1683
  %v1685 = vlaneseq
  %v1686 = vshrl.u32 %v1685, 7
  %v1687 = vsub.s32 %v1684, %v1686
  %v1688 = vrot.slane %v1680, %v1687
  %v1689 = vcombine.high %v1688, %v1688
  %v1691 = vunpack.c.l.s4 1966171168
  %v1692 = vunpack.c.0.s8 %v1691
  %v1693 = vlaneseq
  %v1694 = vshrl.u32 %v1693, 7
  %v1695 = vsub.s32 %v1692, %v1694
  %v1696 = vrot.slane %v1688, %v1695
  %v1698 = vunpack.c.l.s4 1966171168
  %v1699 = vunpack.c.0.s8 %v1698
  %v1700 = vlaneseq
  %v1701 = vshrl.u32 %v1700, 7
  %v1702 = vsub.s32 %v1699, %v1701
  %v1703 = vrot.slane %v1689, %v1702
  %1706 = vst.msk [vmem:[#allocation2 + $0x7] sm:$0x1] %vm410, %v1696
  %1707 = vst.msk [vmem:[#allocation2 + $0xf] sm:$0x1] %vm410, %v1703
  %v1708 = vld [vmem:[#allocation2] sm:$0xff]
  %v1709 = vld [vmem:[#allocation2 + $0x8] sm:$0xff]
  %v1710 = vld [vmem:[%s8] sm:$0xff]
  %v1711 = vld [vmem:[%s9] sm:$0x1]
  %v1713 = vlaneseq
  %v1714 = vshrl.u32 %v1713, 7
  %v1715 = vsub.s32 0, %v1714
  %v1716 = vrot.slane %v1711, %v1715
  %v1719 = vsel %vm233, %v1708, 0
  %v1722 = vsel %vm233, %v1709, 0
  %1724 = vmatprep.subr.mxu0 0.0
  %1725 = vmatpush1.msra.mxu0 %v1710
  %1726 = vmatprep.subr.mxu0 0.0
  %1727 = vmatpush1.msra.mxu0 0.0
  %1728 = vmatprep.subr.mxu0 0.0
  %1729 = vmatpush1.msra.mxu0 0.0
  %1730 = vmatprep.subr.mxu0 0.0
  %1731 = vmatpush1.msra.mxu0 0.0
  %1732 = vmatprep.subr.mxu0 0.0
  %1733 = vmatpush1.msra.mxu0 0.0
  %1734 = vmatprep.subr.mxu0 0.0
  %1735 = vmatpush1.msra.mxu0 0.0
  %1736 = vmatprep.subr.mxu0 0.0
  %1737 = vmatpush1.msra.mxu0 0.0
  %1738 = vmatprep.subr.mxu0 0.0
  %1739 = vmatpush1.msra.mxu0 0.0
  %1740 = vmatprep.subr.mxu0 0.0
  %1741 = vmatpush1.msra.mxu0 0.0
  %1742 = vmatprep.subr.mxu0 0.0
  %1743 = vmatpush1.msra.mxu0 0.0
  %1744 = vmatprep.subr.mxu0 0.0
  %1745 = vmatpush1.msra.mxu0 0.0
  %1746 = vmatprep.subr.mxu0 0.0
  %1747 = vmatpush1.msra.mxu0 0.0
  %1748 = vmatprep.subr.mxu0 0.0
  %1749 = vmatpush1.msra.mxu0 0.0
  %1750 = vmatprep.subr.mxu0 0.0
  %1751 = vmatpush1.msra.mxu0 0.0
  %1752 = vmatprep.subr.mxu0 0.0
  %1753 = vmatpush1.msra.mxu0 0.0
  %1754 = vmatprep.subr.mxu0 0.0
  %1755 = vmatpush1.msra.mxu0 0.0
  %1756 = vmatprep.subr.mxu0 0.0
  %1757 = vmatpush1.msra.mxu0 0.0
  %1758 = vmatprep.subr.mxu0 0.0
  %1759 = vmatpush1.msra.mxu0 0.0
  %1760 = vmatprep.subr.mxu0 0.0
  %1761 = vmatpush1.msra.mxu0 0.0
  %1762 = vmatprep.subr.mxu0 0.0
  %1763 = vmatpush1.msra.mxu0 0.0
  %1764 = vmatprep.subr.mxu0 0.0
  %1765 = vmatpush1.msra.mxu0 0.0
  %1766 = vmatprep.subr.mxu0 0.0
  %1767 = vmatpush1.msra.mxu0 0.0
  %1768 = vmatprep.subr.mxu0 0.0
  %1769 = vmatpush1.msra.mxu0 0.0
  %1770 = vmatprep.subr.mxu0 0.0
  %1771 = vmatpush1.msra.mxu0 0.0
  %1772 = vmatprep.subr.mxu0 0.0
  %1773 = vmatpush1.msra.mxu0 0.0
  %1774 = vmatprep.subr.mxu0 0.0
  %1775 = vmatpush1.msra.mxu0 0.0
  %1776 = vmatprep.subr.mxu0 0.0
  %1777 = vmatpush1.msra.mxu0 0.0
  %1778 = vmatprep.subr.mxu0 0.0
  %1779 = vmatpush1.msra.mxu0 0.0
  %1780 = vmatprep.subr.mxu0 0.0
  %1781 = vmatpush1.msra.mxu0 0.0
  %1782 = vmatprep.subr.mxu0 0.0
  %1783 = vmatpush1.msra.mxu0 0.0
  %1784 = vmatprep.subr.mxu0 0.0
  %1785 = vmatpush1.msra.mxu0 0.0
  %1786 = vmatprep.subr.mxu0 0.0
  %1787 = vmatpush1.msra.mxu0 0.0
  %1788 = vmatprep.mubr.f32.mxu0 0.0
  %1789 = vmatmul.mubr.f32.gmra.mrb[0].mxu0 %v1719
  %v1790 = vpop.f32.mrb[0].mxu0
  %v1791 = vadd.f32 %v1716, %v1790
  %v1792 = vpop.f32.mrb[0].mxu0
  %1793 = vmatprep.mubr.f32.mxu0 0.0
  %1794 = vmatmul.mubr.f32.gmra.mrb[0].mxu0 %v1722
  %v1795 = vpop.f32.mrb[0].mxu0
  %v1796 = vadd.f32 %v1716, %v1795
  %v1797 = vpop.f32.mrb[0].mxu0
  %1798 = vdwg.mxu0
  %1799 = vst.msk [vmem:[%s10] sm:$0xff] %vm137, %v1791
  %1800 = vst.msk [vmem:[%s10 + $0x8] sm:$0xff] %vm137, %v1796
  // Predicated region
  $region42: #{model_forward.1} parent=0 // pred_check
    _
  $region43: #{model_forward.1} parent=0 // pred_check_branch
    %1802 = sbr.rel (0) target = $region45
  $region44: #{model_forward.1} parent=0 // pred_region
    _
  $region45: #{model_forward.1} parent=0 // pred_fallthru
    _
  // Predicated region
  $region46: #{model_forward.1} parent=0 // pred_check
    _
  $region47: #{model_forward.1} parent=0 // pred_check_branch
    %1804 = sbr.rel (0) target = $region49
  $region48: #{model_forward.1} parent=0 // pred_region
    _
  $region49: #{model_forward.1} parent=0 // pred_fallthru
    _

</llo_original>
